<compile_context>
chip_gen: v7x
topology: tpu7x:2x2x1
jax: 0.10.0
libtpu: 0.0.40
codegen_flags: <defaults>
</compile_context>

<pallas_src>
import functools

import jax
import jax.numpy as jnp
from jax.experimental import pallas as pl
from jax.experimental.pallas import tpu as pltpu


# ----------------------------------------------------------------------------
# Pallas kernels (all outputs lane-dense: (Cout, M) with M on the lane axis)
# ----------------------------------------------------------------------------
def _convT_kernel(xT_ref, wT_ref, b_ref, o_ref, *, activ, slope):
    """(Cout, K) @ (K, tn) + bias + activation, lane-dense output (Cout, tn)."""
    acc = jnp.dot(wT_ref[...], xT_ref[...], preferred_element_type=jnp.float32)
    acc = acc + b_ref[...]                      # (Cout, 1) lane-broadcast
    if activ == "leaky":
        acc = jnp.where(acc >= 0.0, acc, slope * acc)
    elif activ == "sigmoid":
        acc = jax.nn.sigmoid(acc)
    o_ref[...] = acc.astype(o_ref.dtype)


def _pow_static(x, a):
    """x ** a for a static positive float a; multiply-only for small integers."""
    a = float(a)
    if a == int(a) and 1.0 <= a <= 16.0:
        n = int(a)
        out, base = None, x
        while True:
            if n & 1:
                out = base if out is None else out * base
            n >>= 1
            if n == 0:
                break
            base = base * base
        return out
    return jnp.exp(a * jnp.log(x))              # generic fallback (uses EUP)


def _enc_heads_gate_kernel(hT_ref, wT_ref, b_ref, randT_ref,
                           probT_ref, gateT_ref, gatedT_ref,
                           gate_hardT_ref, gated_hardT_ref,
                           *, code, alpha, eps):
    """Fused encoder heads (prob + regr conv) + stochastic soft/hard gate epilogue."""
    acc = jnp.dot(wT_ref[...], hT_ref[...], preferred_element_type=jnp.float32)
    acc = acc + b_ref[...]
    prob = jax.nn.sigmoid(acc[:code, :])        # rows 0:code    -> prob head
    regr = acc[code:, :]                        # rows code:2c   -> regr head

    p = jnp.clip(prob, eps, 1.0 - eps)
    u = jnp.clip(randT_ref[...], eps, 1.0 - eps)
    # gate = sigmoid(alpha * (logit(p) - logit(u))) == 1 / (1 + r**alpha),
    # with r = ((1-p)*u) / (p*(1-u)).  No log/log1p/exp needed for integer alpha.
    r = ((1.0 - p) * u) / (p * (1.0 - u))
    gate = 1.0 / (1.0 + _pow_static(r, alpha))

    # hard gate: logit(p) - logit(u) > 0  <=>  p_clamped > u_clamped
    gate_hard = (p > u).astype(jnp.float32)

    probT_ref[...] = prob.astype(probT_ref.dtype)
    gateT_ref[...] = gate.astype(gateT_ref.dtype)
    gatedT_ref[...] = (regr * gate).astype(gatedT_ref.dtype)
    gate_hardT_ref[...] = gate_hard.astype(gate_hardT_ref.dtype)
    gated_hardT_ref[...] = (regr * gate_hard).astype(gated_hardT_ref.dtype)


def _dec_out_pair_kernel(xr_ref, xc_ref, wr_ref, wc_ref, br_ref, bc_ref,
                         or_ref, oc_ref):
    """Both decoder output convs in one kernel: reg (identity) and clf (sigmoid)."""
    accr = jnp.dot(wr_ref[...], xr_ref[...], preferred_element_type=jnp.float32)
    or_ref[...] = (accr + br_ref[...]).astype(or_ref.dtype)
    accc = jnp.dot(wc_ref[...], xc_ref[...], preferred_element_type=jnp.float32)
    oc_ref[...] = jax.nn.sigmoid(accc + bc_ref[...]).astype(oc_ref.dtype)


# ----------------------------------------------------------------------------
# pallas_call wrappers
# ----------------------------------------------------------------------------
def _lane_tile(m, tn):
    """Pick a lane-axis tile: whole M if it divides unevenly / is small, else tn."""
    return m if (m <= tn or m % tn != 0) else tn


def convT_pallas(xT, wT, b, activ=None, slope=0.1, tn=512):
    """Fused conv-as-matmul, transposed layout. xT: (K, M); wT: (Cout, K); b: (Cout, 1)."""
    k, m = xT.shape
    cout = wT.shape[0]
    tn = _lane_tile(m, tn)
    kern = functools.partial(_convT_kernel, activ=activ, slope=slope)
    return pl.pallas_call(
        kern,
        out_shape=jax.ShapeDtypeStruct((cout, m), jnp.float32),
        grid=(m // tn,),
        in_specs=[
            pl.BlockSpec((k, tn), lambda i: (0, i)),
            pl.BlockSpec((cout, k), lambda i: (0, 0)),
            pl.BlockSpec((cout, 1), lambda i: (0, 0)),
        ],
        out_specs=pl.BlockSpec((cout, tn), lambda i: (0, i)),
        compiler_params=pltpu.CompilerParams(dimension_semantics=("parallel",)),
    )(xT, wT, b)


def enc_heads_gate_pallas(hT, wT, b, randT, *, code, alpha, eps, tn=512):
    """Fused prob/regr heads + gate. hT: (K, M); wT: (2*code, K); randT: (code, M)."""
    k, m = hT.shape
    tn = _lane_tile(m, tn)
    kern = functools.partial(_enc_heads_gate_kernel, code=code, alpha=alpha, eps=eps)
    out_sds = tuple(jax.ShapeDtypeStruct((code, m), jnp.float32) for _ in range(5))
    return pl.pallas_call(
        kern,
        out_shape=out_sds,
        grid=(m // tn,),
        in_specs=[
            pl.BlockSpec((k, tn), lambda i: (0, i)),
            pl.BlockSpec((2 * code, k), lambda i: (0, 0)),
            pl.BlockSpec((2 * code, 1), lambda i: (0, 0)),
            pl.BlockSpec((code, tn), lambda i: (0, i)),
        ],
        out_specs=tuple(pl.BlockSpec((code, tn), lambda i: (0, i)) for _ in range(5)),
        compiler_params=pltpu.CompilerParams(dimension_semantics=("parallel",)),
    )(hT, wT, b, randT)


def dec_out_pair_pallas(xrT, xcT, wrT, wcT, br, bc, tn=512):
    """Both decoder output convs in a single pallas_call."""
    k, m = xrT.shape
    cout = wrT.shape[0]
    tn = _lane_tile(m, tn)
    return pl.pallas_call(
        _dec_out_pair_kernel,
        out_shape=(jax.ShapeDtypeStruct((cout, m), jnp.float32),
                   jax.ShapeDtypeStruct((cout, m), jnp.float32)),
        grid=(m // tn,),
        in_specs=[
            pl.BlockSpec((k, tn), lambda i: (0, i)),
            pl.BlockSpec((k, tn), lambda i: (0, i)),
            pl.BlockSpec((cout, k), lambda i: (0, 0)),
            pl.BlockSpec((cout, k), lambda i: (0, 0)),
            pl.BlockSpec((cout, 1), lambda i: (0, 0)),
            pl.BlockSpec((cout, 1), lambda i: (0, 0)),
        ],
        out_specs=(pl.BlockSpec((cout, tn), lambda i: (0, i)),
                   pl.BlockSpec((cout, tn), lambda i: (0, i))),
        compiler_params=pltpu.CompilerParams(dimension_semantics=("parallel",)),
    )(xrT, xcT, wrT, wcT, br, bc)


# ----------------------------------------------------------------------------
# Layout glue (XLA): transposed im2col, NHWC <-> (C, M) conversions
# ----------------------------------------------------------------------------
def _im2col_3x3_T(x_nhwc):
    """3x3, stride 1, pad 1 patches, transposed: returns (9*C, N*H*W), K order (kh,kw,c)."""
    n, h, w, c = x_nhwc.shape
    xp = jnp.pad(x_nhwc, ((0, 0), (1, 1), (1, 1), (0, 0)))
    cols = [xp[:, kh:kh + h, kw:kw + w, :] for kh in range(3) for kw in range(3)]
    pat = jnp.stack(cols, axis=0)            # (9, N, H, W, C)
    pat = pat.transpose(0, 4, 1, 2, 3)       # (9, C, N, H, W)
    return pat.reshape(9 * c, n * h * w)


def _t_to_nhwc(t, n, h, w):
    c = t.shape[0]
    return t.reshape(c, n, h, w).transpose(1, 2, 3, 0)


def _t_to_nchw(t, n, h, w):
    c = t.shape[0]
    return t.reshape(c, n, h, w).transpose(1, 0, 2, 3)


# ----------------------------------------------------------------------------
# Parameter initialization (deterministic, in-script); weights stored pre-fused
# and pre-transposed as (Cout, 9*Cin) for the lane-dense kernels.
# ----------------------------------------------------------------------------
def _conv_w(key, cin, cout):
    return jax.random.normal(key, (3, 3, cin, cout), jnp.float32) / jnp.sqrt(9.0 * cin)


def _to_wT(w_hwio):
    kh, kw, ci, co = w_hwio.shape
    return w_hwio.reshape(kh * kw * ci, co).T  # (Cout, 9*Cin), K order (kh,kw,cin)


def init_bimodel_params(key, c_in=4, hidden=16, code=8):
    keys = jax.random.split(key, 7)
    w_e1 = _conv_w(keys[0], c_in, hidden)
    w_prob = _conv_w(keys[1], hidden, code)
    w_regr = _conv_w(keys[2], hidden, code)
    w_d1r = _conv_w(keys[3], code, hidden)
    w_d2r = _conv_w(keys[4], hidden, c_in)
    w_d1c = _conv_w(keys[5], code, hidden)
    w_d2c = _conv_w(keys[6], hidden, c_in)

    zeros = lambda co: jnp.zeros((co, 1), jnp.float32)
    return {
        "enc_conv1": {"wT": _to_wT(w_e1), "b": zeros(hidden)},
        # encoder prob + regr heads fused along Cout
        "enc_heads": {"wT": _to_wT(jnp.concatenate([w_prob, w_regr], axis=-1)),
                      "b": zeros(2 * code)},
        # decoder_reg.conv1 + decoder_clf.conv1 fused along Cout (shared input)
        "dec_conv1": {"wT": _to_wT(jnp.concatenate([w_d1r, w_d1c], axis=-1)),
                      "b": zeros(2 * hidden)},
        "dec_out_reg": {"wT": _to_wT(w_d2r), "b": zeros(c_in)},
        "dec_out_clf": {"wT": _to_wT(w_d2c), "b": zeros(c_in)},
    }


# ----------------------------------------------------------------------------
# BiModel forward
# ----------------------------------------------------------------------------
def bimodel_forward(params, data_nchw, rng_key, alpha=4.0, eps=1e-6, slope=0.1,
                    return_hard=False):
    x = jnp.transpose(data_nchw, (0, 2, 3, 1)).astype(jnp.float32)  # NCHW -> NHWC
    n, h, w, _ = x.shape
    hh, hw = h // 2, w // 2
    code = params["enc_heads"]["wT"].shape[0] // 2
    hidden = params["dec_conv1"]["wT"].shape[0] // 2

    # ---- encoder: conv1 + leaky, 2x2 avg-pool, fused prob/regr heads + gate ----
    h1T = convT_pallas(_im2col_3x3_T(x), params["enc_conv1"]["wT"],
                       params["enc_conv1"]["b"], activ="leaky", slope=slope)
    h1 = _t_to_nhwc(h1T, n, h, w)
    hp = h1.reshape(n, hh, 2, hw, 2, h1.shape[-1]).mean(axis=(2, 4))   # glue pool

    # torch.rand_like equivalent (uniform [0,1)), deterministic given rng_key
    randT = jax.random.uniform(rng_key, (code, n * hh * hw), dtype=jnp.float32)
    probT, gateT, gatedT, gate_hardT, gated_hardT = enc_heads_gate_pallas(
        _im2col_3x3_T(hp), params["enc_heads"]["wT"], params["enc_heads"]["b"],
        randT, code=code, alpha=alpha, eps=eps)

    # ---- both decoders (fused conv1, fused output convs) ----
    def decode_both(gT):
        g_nhwc = _t_to_nhwc(gT, n, hh, hw)
        hdT = convT_pallas(_im2col_3x3_T(g_nhwc), params["dec_conv1"]["wT"],
                           params["dec_conv1"]["b"], activ="leaky", slope=slope)
        hd = _t_to_nhwc(hdT, n, hh, hw)                    # (n, hh, hw, 2*hidden)
        h_reg, h_clf = hd[..., :hidden], hd[..., hidden:]
        up = lambda t: jnp.repeat(jnp.repeat(t, 2, axis=1), 2, axis=2)  # glue 2x NN
        rT, cT = dec_out_pair_pallas(
            _im2col_3x3_T(up(h_reg)), _im2col_3x3_T(up(h_clf)),
            params["dec_out_reg"]["wT"], params["dec_out_clf"]["wT"],
            params["dec_out_reg"]["b"], params["dec_out_clf"]["b"])
        return _t_to_nchw(rT, n, h, w), _t_to_nchw(cT, n, h, w)

    reco_reg, reco_clf = decode_both(gatedT)

    result = {
        "prob": _t_to_nchw(probT, n, hh, hw),
        "gate": _t_to_nchw(gateT, n, hh, hw),
        "reco_reg": reco_reg,
        "reco_clf": reco_clf,
    }

    if return_hard:
        reco_reg_hard, reco_clf_hard = decode_both(gated_hardT)
        result["gate_hard"] = _t_to_nchw(gate_hardT, n, hh, hw).astype(jnp.bool_)
        result["reco_reg_hard"] = reco_reg_hard
        result["reco_clf_hard"] = reco_clf_hard
    return result


# ----------------------------------------------------------------------------
# Main
# ----------------------------------------------------------------------------
if __name__ == "__main__":
    key = jax.random.PRNGKey(0)
    k_param, k_data, k_gate = jax.random.split(key, 3)

    # small synthetic input: batch=2, channels=4, spatial=16x16 (NCHW like PyTorch)
    x = jax.random.normal(k_data, (2, 4, 16, 16), jnp.float32)
    params = init_bimodel_params(k_param, c_in=4, hidden=16, code=8)

    fwd = jax.jit(bimodel_forward,
                  static_argnames=("alpha", "eps", "slope", "return_hard"))
    result = fwd(params, x, k_gate, alpha=4.0, eps=1e-6, return_hard=False)
    result = jax.block_until_ready(result)

    # light sanity checks on shapes / value ranges
    assert result["prob"].shape == (2, 8, 8, 8)
    assert result["gate"].shape == (2, 8, 8, 8)
    assert result["reco_reg"].shape == (2, 4, 16, 16)
    assert result["reco_clf"].shape == (2, 4, 16, 16)
    assert bool(jnp.all((result["prob"] >= 0.0) & (result["prob"] <= 1.0)))
    assert bool(jnp.all((result["gate"] >= 0.0) & (result["gate"] <= 1.0)))
    assert bool(jnp.all((result["reco_clf"] >= 0.0) & (result["reco_clf"] <= 1.0)))

    print("KERNEL_OK")
</pallas_src>

<mosaic_0001>
module attributes {stable_mosaic.version = 11 : i64} {
  func.func @_convT_kernel(%arg0: i32, %arg1: memref<36x512xf32, #tpu.memory_space<vmem>>, %arg2: memref<16x36xf32, #tpu.memory_space<vmem>>, %arg3: memref<16x1xf32, #tpu.memory_space<vmem>>, %arg4: memref<16x512xf32, #tpu.memory_space<vmem>>) attributes {dimension_semantics = [#tpu.dimension_semantics<parallel>], iteration_bounds = array<i64: 1>, scalar_prefetch = 0 : i64, scratch_operands = 0 : i64, tpu.core_type = #tpu.core_type<tc>, window_params = [{transform_indices = @transform_0, window_bounds = array<i64: 36, 512>}, {pipeline_mode = #tpu.pipeline_mode<synchronous>, transform_indices = @transform_1, window_bounds = array<i64: 16, 36>}, {pipeline_mode = #tpu.pipeline_mode<synchronous>, transform_indices = @transform_2, window_bounds = array<i64: 16, 1>}, {transform_indices = @transform_3, window_bounds = array<i64: 16, 512>}]} {
    %c0 = arith.constant 0 : index
    %c0_0 = arith.constant 0 : index
    %0 = vector.load %arg2[%c0, %c0_0] : memref<16x36xf32, #tpu.memory_space<vmem>>, vector<16x36xf32>
    %c0_1 = arith.constant 0 : index
    %c0_2 = arith.constant 0 : index
    %1 = vector.load %arg1[%c0_1, %c0_2] : memref<36x512xf32, #tpu.memory_space<vmem>>, vector<36x512xf32>
    %cst = arith.constant dense<0.000000e+00> : vector<16x512xf32>
    %2 = tpu.matmul %0, %1, %cst {dimension_numbers = #tpu.dot_dimension_numbers<[1], [0], [0], [1], [0, 0, 1, 1], [], []>} : vector<16x36xf32>, vector<36x512xf32>, vector<16x512xf32> -> vector<16x512xf32>
    %c0_3 = arith.constant 0 : index
    %c0_4 = arith.constant 0 : index
    %3 = vector.load %arg3[%c0_3, %c0_4] : memref<16x1xf32, #tpu.memory_space<vmem>>, vector<16x1xf32>
    %4 = vector.broadcast %3 : vector<16x1xf32> to vector<16x512xf32>
    %5 = arith.addf %2, %4 : vector<16x512xf32>
    %cst_5 = arith.constant 0.000000e+00 : f32
    %6 = vector.broadcast %cst_5 : f32 to vector<16x512xf32>
    %7 = arith.cmpf oge, %5, %6 : vector<16x512xf32>
    %cst_6 = arith.constant 1.000000e-01 : f32
    %8 = vector.broadcast %cst_6 : f32 to vector<16x512xf32>
    %9 = arith.mulf %8, %5 : vector<16x512xf32>
    %10 = arith.select %7, %5, %9 : vector<16x512xi1>, vector<16x512xf32>
    %c0_7 = arith.constant 0 : index
    %c0_8 = arith.constant 0 : index
    %11 = vector.load %arg4[%c0_7, %c0_8] : memref<16x512xf32, #tpu.memory_space<vmem>>, vector<16x512xf32>
    tpu.vector_store %arg4[%c0_7, %c0_8], %10 {strides = array<i32>} : memref<16x512xf32, #tpu.memory_space<vmem>>, vector<16x512xf32>,
    return
  }
  func.func @transform_0(%arg0: i32) -> (i32, i32) {
    %c0_i32 = arith.constant 0 : i32
    %c0_i32_0 = arith.constant 0 : i32
    return %c0_i32, %arg0 : i32, i32
  }
  func.func @transform_1(%arg0: i32) -> (i32, i32) {
    %c0_i32 = arith.constant 0 : i32
    %c0_i32_0 = arith.constant 0 : i32
    %c0_i32_1 = arith.constant 0 : i32
    return %c0_i32, %c0_i32_0 : i32, i32
  }
  func.func @transform_2(%arg0: i32) -> (i32, i32) {
    %c0_i32 = arith.constant 0 : i32
    %c0_i32_0 = arith.constant 0 : i32
    %c0_i32_1 = arith.constant 0 : i32
    return %c0_i32, %c0_i32_0 : i32, i32
  }
  func.func @transform_3(%arg0: i32) -> (i32, i32) {
    %c0_i32 = arith.constant 0 : i32
    %c0_i32_0 = arith.constant 0 : i32
    return %c0_i32, %arg0 : i32, i32
  }
}

module attributes {stable_mosaic.version = 11 : i64} {
  func.func @_enc_heads_gate_kernel(%arg0: i32, %arg1: memref<144x128xf32, #tpu.memory_space<vmem>>, %arg2: memref<16x144xf32, #tpu.memory_space<vmem>>, %arg3: memref<16x1xf32, #tpu.memory_space<vmem>>, %arg4: memref<8x128xf32, #tpu.memory_space<vmem>>, %arg5: memref<8x128xf32, #tpu.memory_space<vmem>>, %arg6: memref<8x128xf32, #tpu.memory_space<vmem>>, %arg7: memref<8x128xf32, #tpu.memory_space<vmem>>, %arg8: memref<8x128xf32, #tpu.memory_space<vmem>>, %arg9: memref<8x128xf32, #tpu.memory_space<vmem>>) attributes {dimension_semantics = [#tpu.dimension_semantics<parallel>], iteration_bounds = array<i64: 1>, scalar_prefetch = 0 : i64, scratch_operands = 0 : i64, tpu.core_type = #tpu.core_type<tc>, window_params = [{transform_indices = @transform_0, window_bounds = array<i64: 144, 128>}, {pipeline_mode = #tpu.pipeline_mode<synchronous>, transform_indices = @transform_1, window_bounds = array<i64: 16, 144>}, {pipeline_mode = #tpu.pipeline_mode<synchronous>, transform_indices = @transform_2, window_bounds = array<i64: 16, 1>}, {transform_indices = @transform_3, window_bounds = array<i64: 8, 128>}, {transform_indices = @transform_4, window_bounds = array<i64: 8, 128>}, {transform_indices = @transform_5, window_bounds = array<i64: 8, 128>}, {transform_indices = @transform_6, window_bounds = array<i64: 8, 128>}, {transform_indices = @transform_7, window_bounds = array<i64: 8, 128>}, {transform_indices = @transform_8, window_bounds = array<i64: 8, 128>}]} {
    %c0 = arith.constant 0 : index
    %c0_0 = arith.constant 0 : index
    %0 = vector.load %arg2[%c0, %c0_0] : memref<16x144xf32, #tpu.memory_space<vmem>>, vector<16x144xf32>
    %c0_1 = arith.constant 0 : index
    %c0_2 = arith.constant 0 : index
    %1 = vector.load %arg1[%c0_1, %c0_2] : memref<144x128xf32, #tpu.memory_space<vmem>>, vector<144x128xf32>
    %cst = arith.constant dense<0.000000e+00> : vector<16x128xf32>
    %2 = tpu.matmul %0, %1, %cst {dimension_numbers = #tpu.dot_dimension_numbers<[1], [0], [0], [1], [0, 0, 1, 1], [], []>} : vector<16x144xf32>, vector<144x128xf32>, vector<16x128xf32> -> vector<16x128xf32>
    %c0_3 = arith.constant 0 : index
    %c0_4 = arith.constant 0 : index
    %3 = vector.load %arg3[%c0_3, %c0_4] : memref<16x1xf32, #tpu.memory_space<vmem>>, vector<16x1xf32>
    %4 = vector.broadcast %3 : vector<16x1xf32> to vector<16x128xf32>
    %5 = arith.addf %2, %4 : vector<16x128xf32>
    %6 = vector.extract_strided_slice %5 {offsets = [0, 0], sizes = [8, 128], strides = [1, 1]} : vector<16x128xf32> to vector<8x128xf32>
    %7 = arith.negf %6 : vector<8x128xf32>
    %8 = math.exp %7 : vector<8x128xf32>
    %cst_5 = arith.constant 1.000000e+00 : f32
    %9 = vector.broadcast %cst_5 : f32 to vector<8x128xf32>
    %10 = arith.addf %9, %8 : vector<8x128xf32>
    %11 = arith.divf %9, %10 : vector<8x128xf32>
    %12 = vector.extract_strided_slice %5 {offsets = [8, 0], sizes = [8, 128], strides = [1, 1]} : vector<16x128xf32> to vector<8x128xf32>
    %cst_6 = arith.constant 9.99999997E-7 : f32
    %cst_7 = arith.constant 0.999998986 : f32
    %13 = vector.broadcast %cst_6 : f32 to vector<8x128xf32>
    %14 = arith.maximumf %13, %11 : vector<8x128xf32>
    %15 = vector.broadcast %cst_7 : f32 to vector<8x128xf32>
    %16 = arith.minimumf %15, %14 : vector<8x128xf32>
    %c0_8 = arith.constant 0 : index
    %c0_9 = arith.constant 0 : index
    %17 = vector.load %arg4[%c0_8, %c0_9] : memref<8x128xf32, #tpu.memory_space<vmem>>, vector<8x128xf32>
    %cst_10 = arith.constant 9.99999997E-7 : f32
    %cst_11 = arith.constant 0.999998986 : f32
    %18 = vector.broadcast %cst_10 : f32 to vector<8x128xf32>
    %19 = arith.maximumf %18, %17 : vector<8x128xf32>
    %20 = vector.broadcast %cst_11 : f32 to vector<8x128xf32>
    %21 = arith.minimumf %20, %19 : vector<8x128xf32>
    %cst_12 = arith.constant 1.000000e+00 : f32
    %22 = vector.broadcast %cst_12 : f32 to vector<8x128xf32>
    %23 = arith.subf %22, %16 : vector<8x128xf32>
    %24 = arith.mulf %23, %21 : vector<8x128xf32>
    %cst_13 = arith.constant 1.000000e+00 : f32
    %25 = vector.broadcast %cst_13 : f32 to vector<8x128xf32>
    %26 = arith.subf %25, %21 : vector<8x128xf32>
    %27 = arith.mulf %16, %26 : vector<8x128xf32>
    %28 = arith.divf %24, %27 : vector<8x128xf32>
    %29 = arith.mulf %28, %28 : vector<8x128xf32>
    %30 = arith.mulf %29, %29 : vector<8x128xf32>
    %cst_14 = arith.constant 1.000000e+00 : f32
    %31 = vector.broadcast %cst_14 : f32 to vector<8x128xf32>
    %32 = arith.addf %31, %30 : vector<8x128xf32>
    %cst_15 = arith.constant 1.000000e+00 : f32
    %33 = vector.broadcast %cst_15 : f32 to vector<8x128xf32>
    %34 = arith.divf %33, %32 : vector<8x128xf32>
    %35 = arith.cmpf ogt, %16, %21 : vector<8x128xf32>
    %36 = arith.extui %35 : vector<8x128xi1> to vector<8x128xi32>
    %37 = arith.sitofp %36 : vector<8x128xi32> to vector<8x128xf32>
    %c0_16 = arith.constant 0 : index
    %c0_17 = arith.constant 0 : index
    %38 = vector.load %arg5[%c0_16, %c0_17] : memref<8x128xf32, #tpu.memory_space<vmem>>, vector<8x128xf32>
    tpu.vector_store %arg5[%c0_16, %c0_17], %11 {strides = array<i32>} : memref<8x128xf32, #tpu.memory_space<vmem>>, vector<8x128xf32>,
    %c0_18 = arith.constant 0 : index
    %c0_19 = arith.constant 0 : index
    %39 = vector.load %arg6[%c0_18, %c0_19] : memref<8x128xf32, #tpu.memory_space<vmem>>, vector<8x128xf32>
    tpu.vector_store %arg6[%c0_18, %c0_19], %34 {strides = array<i32>} : memref<8x128xf32, #tpu.memory_space<vmem>>, vector<8x128xf32>,
    %40 = arith.mulf %12, %34 : vector<8x128xf32>
    %c0_20 = arith.constant 0 : index
    %c0_21 = arith.constant 0 : index
    %41 = vector.load %arg7[%c0_20, %c0_21] : memref<8x128xf32, #tpu.memory_space<vmem>>, vector<8x128xf32>
    tpu.vector_store %arg7[%c0_20, %c0_21], %40 {strides = array<i32>} : memref<8x128xf32, #tpu.memory_space<vmem>>, vector<8x128xf32>,
    %c0_22 = arith.constant 0 : index
    %c0_23 = arith.constant 0 : index
    %42 = vector.load %arg8[%c0_22, %c0_23] : memref<8x128xf32, #tpu.memory_space<vmem>>, vector<8x128xf32>
    tpu.vector_store %arg8[%c0_22, %c0_23], %37 {strides = array<i32>} : memref<8x128xf32, #tpu.memory_space<vmem>>, vector<8x128xf32>,
    %43 = arith.mulf %12, %37 : vector<8x128xf32>
    %c0_24 = arith.constant 0 : index
    %c0_25 = arith.constant 0 : index
    %44 = vector.load %arg9[%c0_24, %c0_25] : memref<8x128xf32, #tpu.memory_space<vmem>>, vector<8x128xf32>
    tpu.vector_store %arg9[%c0_24, %c0_25], %43 {strides = array<i32>} : memref<8x128xf32, #tpu.memory_space<vmem>>, vector<8x128xf32>,
    return
  }
  func.func @transform_0(%arg0: i32) -> (i32, i32) {
    %c0_i32 = arith.constant 0 : i32
    %c0_i32_0 = arith.constant 0 : i32
    return %c0_i32, %arg0 : i32, i32
  }
  func.func @transform_1(%arg0: i32) -> (i32, i32) {
    %c0_i32 = arith.constant 0 : i32
    %c0_i32_0 = arith.constant 0 : i32
    %c0_i32_1 = arith.constant 0 : i32
    return %c0_i32, %c0_i32_0 : i32, i32
  }
  func.func @transform_2(%arg0: i32) -> (i32, i32) {
    %c0_i32 = arith.constant 0 : i32
    %c0_i32_0 = arith.constant 0 : i32
    %c0_i32_1 = arith.constant 0 : i32
    return %c0_i32, %c0_i32_0 : i32, i32
  }
  func.func @transform_3(%arg0: i32) -> (i32, i32) {
    %c0_i32 = arith.constant 0 : i32
    %c0_i32_0 = arith.constant 0 : i32
    return %c0_i32, %arg0 : i32, i32
  }
  func.func @transform_4(%arg0: i32) -> (i32, i32) {
    %c0_i32 = arith.constant 0 : i32
    %c0_i32_0 = arith.constant 0 : i32
    return %c0_i32, %arg0 : i32, i32
  }
  func.func @transform_5(%arg0: i32) -> (i32, i32) {
    %c0_i32 = arith.constant 0 : i32
    %c0_i32_0 = arith.constant 0 : i32
    return %c0_i32, %arg0 : i32, i32
  }
  func.func @transform_6(%arg0: i32) -> (i32, i32) {
    %c0_i32 = arith.constant 0 : i32
    %c0_i32_0 = arith.constant 0 : i32
    return %c0_i32, %arg0 : i32, i32
  }
  func.func @transform_7(%arg0: i32) -> (i32, i32) {
    %c0_i32 = arith.constant 0 : i32
    %c0_i32_0 = arith.constant 0 : i32
    return %c0_i32, %arg0 : i32, i32
  }
  func.func @transform_8(%arg0: i32) -> (i32, i32) {
    %c0_i32 = arith.constant 0 : i32
    %c0_i32_0 = arith.constant 0 : i32
    return %c0_i32, %arg0 : i32, i32
  }
}

module attributes {stable_mosaic.version = 11 : i64} {
  func.func @_convT_kernel(%arg0: i32, %arg1: memref<72x128xf32, #tpu.memory_space<vmem>>, %arg2: memref<32x72xf32, #tpu.memory_space<vmem>>, %arg3: memref<32x1xf32, #tpu.memory_space<vmem>>, %arg4: memref<32x128xf32, #tpu.memory_space<vmem>>) attributes {dimension_semantics = [#tpu.dimension_semantics<parallel>], iteration_bounds = array<i64: 1>, scalar_prefetch = 0 : i64, scratch_operands = 0 : i64, tpu.core_type = #tpu.core_type<tc>, window_params = [{transform_indices = @transform_0, window_bounds = array<i64: 72, 128>}, {pipeline_mode = #tpu.pipeline_mode<synchronous>, transform_indices = @transform_1, window_bounds = array<i64: 32, 72>}, {pipeline_mode = #tpu.pipeline_mode<synchronous>, transform_indices = @transform_2, window_bounds = array<i64: 32, 1>}, {transform_indices = @transform_3, window_bounds = array<i64: 32, 128>}]} {
    %c0 = arith.constant 0 : index
    %c0_0 = arith.constant 0 : index
    %0 = vector.load %arg2[%c0, %c0_0] : memref<32x72xf32, #tpu.memory_space<vmem>>, vector<32x72xf32>
    %c0_1 = arith.constant 0 : index
    %c0_2 = arith.constant 0 : index
    %1 = vector.load %arg1[%c0_1, %c0_2] : memref<72x128xf32, #tpu.memory_space<vmem>>, vector<72x128xf32>
    %cst = arith.constant dense<0.000000e+00> : vector<32x128xf32>
    %2 = tpu.matmul %0, %1, %cst {dimension_numbers = #tpu.dot_dimension_numbers<[1], [0], [0], [1], [0, 0, 1, 1], [], []>} : vector<32x72xf32>, vector<72x128xf32>, vector<32x128xf32> -> vector<32x128xf32>
    %c0_3 = arith.constant 0 : index
    %c0_4 = arith.constant 0 : index
    %3 = vector.load %arg3[%c0_3, %c0_4] : memref<32x1xf32, #tpu.memory_space<vmem>>, vector<32x1xf32>
    %4 = vector.broadcast %3 : vector<32x1xf32> to vector<32x128xf32>
    %5 = arith.addf %2, %4 : vector<32x128xf32>
    %cst_5 = arith.constant 0.000000e+00 : f32
    %6 = vector.broadcast %cst_5 : f32 to vector<32x128xf32>
    %7 = arith.cmpf oge, %5, %6 : vector<32x128xf32>
    %cst_6 = arith.constant 1.000000e-01 : f32
    %8 = vector.broadcast %cst_6 : f32 to vector<32x128xf32>
    %9 = arith.mulf %8, %5 : vector<32x128xf32>
    %10 = arith.select %7, %5, %9 : vector<32x128xi1>, vector<32x128xf32>
    %c0_7 = arith.constant 0 : index
    %c0_8 = arith.constant 0 : index
    %11 = vector.load %arg4[%c0_7, %c0_8] : memref<32x128xf32, #tpu.memory_space<vmem>>, vector<32x128xf32>
    tpu.vector_store %arg4[%c0_7, %c0_8], %10 {strides = array<i32>} : memref<32x128xf32, #tpu.memory_space<vmem>>, vector<32x128xf32>,
    return
  }
  func.func @transform_0(%arg0: i32) -> (i32, i32) {
    %c0_i32 = arith.constant 0 : i32
    %c0_i32_0 = arith.constant 0 : i32
    return %c0_i32, %arg0 : i32, i32
  }
  func.func @transform_1(%arg0: i32) -> (i32, i32) {
    %c0_i32 = arith.constant 0 : i32
    %c0_i32_0 = arith.constant 0 : i32
    %c0_i32_1 = arith.constant 0 : i32
    return %c0_i32, %c0_i32_0 : i32, i32
  }
  func.func @transform_2(%arg0: i32) -> (i32, i32) {
    %c0_i32 = arith.constant 0 : i32
    %c0_i32_0 = arith.constant 0 : i32
    %c0_i32_1 = arith.constant 0 : i32
    return %c0_i32, %c0_i32_0 : i32, i32
  }
  func.func @transform_3(%arg0: i32) -> (i32, i32) {
    %c0_i32 = arith.constant 0 : i32
    %c0_i32_0 = arith.constant 0 : i32
    return %c0_i32, %arg0 : i32, i32
  }
}

module attributes {stable_mosaic.version = 11 : i64} {
  func.func @_dec_out_pair_kernel(%arg0: i32, %arg1: memref<144x512xf32, #tpu.memory_space<vmem>>, %arg2: memref<144x512xf32, #tpu.memory_space<vmem>>, %arg3: memref<4x144xf32, #tpu.memory_space<vmem>>, %arg4: memref<4x144xf32, #tpu.memory_space<vmem>>, %arg5: memref<4x1xf32, #tpu.memory_space<vmem>>, %arg6: memref<4x1xf32, #tpu.memory_space<vmem>>, %arg7: memref<4x512xf32, #tpu.memory_space<vmem>>, %arg8: memref<4x512xf32, #tpu.memory_space<vmem>>) attributes {dimension_semantics = [#tpu.dimension_semantics<parallel>], iteration_bounds = array<i64: 1>, scalar_prefetch = 0 : i64, scratch_operands = 0 : i64, tpu.core_type = #tpu.core_type<tc>, window_params = [{transform_indices = @transform_0, window_bounds = array<i64: 144, 512>}, {transform_indices = @transform_1, window_bounds = array<i64: 144, 512>}, {pipeline_mode = #tpu.pipeline_mode<synchronous>, transform_indices = @transform_2, window_bounds = array<i64: 4, 144>}, {pipeline_mode = #tpu.pipeline_mode<synchronous>, transform_indices = @transform_3, window_bounds = array<i64: 4, 144>}, {pipeline_mode = #tpu.pipeline_mode<synchronous>, transform_indices = @transform_4, window_bounds = array<i64: 4, 1>}, {pipeline_mode = #tpu.pipeline_mode<synchronous>, transform_indices = @transform_5, window_bounds = array<i64: 4, 1>}, {transform_indices = @transform_6, window_bounds = array<i64: 4, 512>}, {transform_indices = @transform_7, window_bounds = array<i64: 4, 512>}]} {
    %c0 = arith.constant 0 : index
    %c0_0 = arith.constant 0 : index
    %0 = vector.load %arg3[%c0, %c0_0] : memref<4x144xf32, #tpu.memory_space<vmem>>, vector<4x144xf32>
    %c0_1 = arith.constant 0 : index
    %c0_2 = arith.constant 0 : index
    %1 = vector.load %arg1[%c0_1, %c0_2] : memref<144x512xf32, #tpu.memory_space<vmem>>, vector<144x512xf32>
    %cst = arith.constant dense<0.000000e+00> : vector<4x512xf32>
    %2 = tpu.matmul %0, %1, %cst {dimension_numbers = #tpu.dot_dimension_numbers<[1], [0], [0], [1], [0, 0, 1, 1], [], []>} : vector<4x144xf32>, vector<144x512xf32>, vector<4x512xf32> -> vector<4x512xf32>
    %c0_3 = arith.constant 0 : index
    %c0_4 = arith.constant 0 : index
    %3 = vector.load %arg5[%c0_3, %c0_4] : memref<4x1xf32, #tpu.memory_space<vmem>>, vector<4x1xf32>
    %4 = vector.broadcast %3 : vector<4x1xf32> to vector<4x512xf32>
    %5 = arith.addf %2, %4 : vector<4x512xf32>
    %c0_5 = arith.constant 0 : index
    %c0_6 = arith.constant 0 : index
    %6 = vector.load %arg7[%c0_5, %c0_6] : memref<4x512xf32, #tpu.memory_space<vmem>>, vector<4x512xf32>
    tpu.vector_store %arg7[%c0_5, %c0_6], %5 {strides = array<i32>} : memref<4x512xf32, #tpu.memory_space<vmem>>, vector<4x512xf32>,
    %c0_7 = arith.constant 0 : index
    %c0_8 = arith.constant 0 : index
    %7 = vector.load %arg4[%c0_7, %c0_8] : memref<4x144xf32, #tpu.memory_space<vmem>>, vector<4x144xf32>
    %c0_9 = arith.constant 0 : index
    %c0_10 = arith.constant 0 : index
    %8 = vector.load %arg2[%c0_9, %c0_10] : memref<144x512xf32, #tpu.memory_space<vmem>>, vector<144x512xf32>
    %cst_11 = arith.constant dense<0.000000e+00> : vector<4x512xf32>
    %9 = tpu.matmul %7, %8, %cst_11 {dimension_numbers = #tpu.dot_dimension_numbers<[1], [0], [0], [1], [0, 0, 1, 1], [], []>} : vector<4x144xf32>, vector<144x512xf32>, vector<4x512xf32> -> vector<4x512xf32>
    %c0_12 = arith.constant 0 : index
    %c0_13 = arith.constant 0 : index
    %10 = vector.load %arg6[%c0_12, %c0_13] : memref<4x1xf32, #tpu.memory_space<vmem>>, vector<4x1xf32>
    %11 = vector.broadcast %10 : vector<4x1xf32> to vector<4x512xf32>
    %12 = arith.addf %9, %11 : vector<4x512xf32>
    %13 = arith.negf %12 : vector<4x512xf32>
    %14 = math.exp %13 : vector<4x512xf32>
    %cst_14 = arith.constant 1.000000e+00 : f32
    %15 = vector.broadcast %cst_14 : f32 to vector<4x512xf32>
    %16 = arith.addf %15, %14 : vector<4x512xf32>
    %17 = arith.divf %15, %16 : vector<4x512xf32>
    %c0_15 = arith.constant 0 : index
    %c0_16 = arith.constant 0 : index
    %18 = vector.load %arg8[%c0_15, %c0_16] : memref<4x512xf32, #tpu.memory_space<vmem>>, vector<4x512xf32>
    tpu.vector_store %arg8[%c0_15, %c0_16], %17 {strides = array<i32>} : memref<4x512xf32, #tpu.memory_space<vmem>>, vector<4x512xf32>,
    return
  }
  func.func @transform_0(%arg0: i32) -> (i32, i32) {
    %c0_i32 = arith.constant 0 : i32
    %c0_i32_0 = arith.constant 0 : i32
    return %c0_i32, %arg0 : i32, i32
  }
  func.func @transform_1(%arg0: i32) -> (i32, i32) {
    %c0_i32 = arith.constant 0 : i32
    %c0_i32_0 = arith.constant 0 : i32
    return %c0_i32, %arg0 : i32, i32
  }
  func.func @transform_2(%arg0: i32) -> (i32, i32) {
    %c0_i32 = arith.constant 0 : i32
    %c0_i32_0 = arith.constant 0 : i32
    %c0_i32_1 = arith.constant 0 : i32
    return %c0_i32, %c0_i32_0 : i32, i32
  }
  func.func @transform_3(%arg0: i32) -> (i32, i32) {
    %c0_i32 = arith.constant 0 : i32
    %c0_i32_0 = arith.constant 0 : i32
    %c0_i32_1 = arith.constant 0 : i32
    return %c0_i32, %c0_i32_0 : i32, i32
  }
  func.func @transform_4(%arg0: i32) -> (i32, i32) {
    %c0_i32 = arith.constant 0 : i32
    %c0_i32_0 = arith.constant 0 : i32
    %c0_i32_1 = arith.constant 0 : i32
    return %c0_i32, %c0_i32_0 : i32, i32
  }
  func.func @transform_5(%arg0: i32) -> (i32, i32) {
    %c0_i32 = arith.constant 0 : i32
    %c0_i32_0 = arith.constant 0 : i32
    %c0_i32_1 = arith.constant 0 : i32
    return %c0_i32, %c0_i32_0 : i32, i32
  }
  func.func @transform_6(%arg0: i32) -> (i32, i32) {
    %c0_i32 = arith.constant 0 : i32
    %c0_i32_0 = arith.constant 0 : i32
    return %c0_i32, %arg0 : i32, i32
  }
  func.func @transform_7(%arg0: i32) -> (i32, i32) {
    %c0_i32 = arith.constant 0 : i32
    %c0_i32_0 = arith.constant 0 : i32
    return %c0_i32, %arg0 : i32, i32
  }
}

</mosaic_0001>

<llo_original>
// kernel: bimodel_forward.4
$region0: #{bimodel_forward.4}
  #allocation0 [shape = 'u32[]', space=smem, size = 0x4, offset = 0x4, fixed_abs, tag = 'smem constant byte address 0x4 - core index']
  #allocation1 [shape = 'u32[144,128]{1,0:T(1,128)}', space=vmem, size = 0x12000, scoped, tag = 'internal scratch']
  %s0 = inlined_call_operand.vmem [shape: f32[36,512], index: 0, kind: input, shape index: {}]
  %s1 = inlined_call_operand.vmem [shape: f32[16,36], index: 1, kind: input, shape index: {}]
  %s2 = inlined_call_operand.vmem [shape: f32[16,1], index: 2, kind: input, shape index: {}]
  %s3 = inlined_call_operand.vmem [shape: f32[16,512], index: 3, kind: output, shape index: {}]
  %s4 = sld [smem:[#allocation0]]
  $region22: #{bimodel_forward.4} parent=0
    _
  %s6 = ssub.s32 1, %s4
  %s7 = scalar_select 0, %s6, %s4
  // Predicated region
  $region2: #{bimodel_forward.4} parent=0 // pred_check
    _
  $region3: #{bimodel_forward.4} parent=0 // pred_check_branch
    %9 = sbr.rel (0) target = $region5
  $region4: #{bimodel_forward.4} parent=0 // pred_region
    _
  $region5: #{bimodel_forward.4} parent=0 // pred_fallthru
    _
  // Predicated region
  $region6: #{bimodel_forward.4} parent=0 // pred_check
    _
  $region7: #{bimodel_forward.4} parent=0 // pred_check_branch
    %11 = sbr.rel (0) target = $region9
  $region8: #{bimodel_forward.4} parent=0 // pred_region
    _
  $region9: #{bimodel_forward.4} parent=0 // pred_fallthru
    _
  // Predicated region
  $region10: #{bimodel_forward.4} parent=0 // pred_check
    _
  $region11: #{bimodel_forward.4} parent=0 // pred_check_branch
    %13 = sbr.rel (0) target = $region13
  $region12: #{bimodel_forward.4} parent=0 // pred_region
    _
  $region13: #{bimodel_forward.4} parent=0 // pred_fallthru
    _
  %v14 = vld [vmem:[%s1] sm:$0xff]
  %v15 = vld [vmem:[%s1 + $0x8] sm:$0xff]
  %v16 = vld [vmem:[%s0] sm:$0xff]
  %v17 = vld [vmem:[%s0 + $0x8] sm:$0xff]
  %v18 = vld [vmem:[%s0 + $0x10] sm:$0xff]
  %v19 = vld [vmem:[%s0 + $0x18] sm:$0xff]
  %v20 = vld [vmem:[%s0 + $0x20] sm:$0xff]
  %v21 = vld [vmem:[%s0 + $0x28] sm:$0xff]
  %v22 = vld [vmem:[%s0 + $0x30] sm:$0xff]
  %v23 = vld [vmem:[%s0 + $0x38] sm:$0xff]
  %v24 = vld [vmem:[%s0 + $0x40] sm:$0xff]
  %v25 = vld [vmem:[%s0 + $0x48] sm:$0xff]
  %v26 = vld [vmem:[%s0 + $0x50] sm:$0xff]
  %v27 = vld [vmem:[%s0 + $0x58] sm:$0xff]
  %v28 = vld [vmem:[%s0 + $0x60] sm:$0xff]
  %v29 = vld [vmem:[%s0 + $0x68] sm:$0xff]
  %v30 = vld [vmem:[%s0 + $0x70] sm:$0xff]
  %v31 = vld [vmem:[%s0 + $0x78] sm:$0xff]
  %v32 = vld [vmem:[%s0 + $0x80] sm:$0xf]
  %v33 = vld [vmem:[%s0 + $0x88] sm:$0xf]
  %v34 = vld [vmem:[%s0 + $0x90] sm:$0xf]
  %v35 = vld [vmem:[%s0 + $0x98] sm:$0xf]
  %v36 = vld [vmem:[%s2] sm:$0xff]
  %v37 = vld [vmem:[%s2 + $0x8] sm:$0xff]
  %39 = vset.pattern.permute.xlu0 0
  %40 = vperm.xlu0 %39, %v36
  %v41 = vpop.permute.xlu0 %40
  %44 = vset.pattern.permute.xlu0 0
  %45 = vperm.xlu0 %44, %v37
  %v46 = vpop.permute.xlu0 %45
  %vm48 = vcmask 293888
  %v50 = vsel %vm48, %v14, 0
  %v53 = vsel %vm48, %v15, 0
  %vm55 = vcmask 1043456
  %v57 = vsel %vm55, %v32, 0
  %v60 = vsel %vm55, %v33, 0
  %v63 = vsel %vm55, %v34, 0
  %v66 = vsel %vm55, %v35, 0
  %68 = vmatprep.subr.mxu0 %v17
  %69 = vmatpush1.msra.mxu0 %v16
  %70 = vmatprep.subr.mxu0 %v21
  %71 = vmatpush1.msra.mxu0 %v20
  %72 = vmatprep.subr.mxu0 %v25
  %73 = vmatpush1.msra.mxu0 %v24
  %74 = vmatprep.subr.mxu0 %v29
  %75 = vmatpush1.msra.mxu0 %v28
  %76 = vmatprep.subr.mxu0 %v60
  %77 = vmatpush1.msra.mxu0 %v57
  %78 = vmatprep.subr.mxu0 0.0
  %79 = vmatpush1.msra.mxu0 0.0
  %80 = vmatprep.subr.mxu0 0.0
  %81 = vmatpush1.msra.mxu0 0.0
  %82 = vmatprep.subr.mxu0 0.0
  %83 = vmatpush1.msra.mxu0 0.0
  %84 = vmatprep.subr.mxu0 0.0
  %85 = vmatpush1.msra.mxu0 0.0
  %86 = vmatprep.subr.mxu0 0.0
  %87 = vmatpush1.msra.mxu0 0.0
  %88 = vmatprep.subr.mxu0 0.0
  %89 = vmatpush1.msra.mxu0 0.0
  %90 = vmatprep.subr.mxu0 0.0
  %91 = vmatpush1.msra.mxu0 0.0
  %92 = vmatprep.subr.mxu0 0.0
  %93 = vmatpush1.msra.mxu0 0.0
  %94 = vmatprep.subr.mxu0 0.0
  %95 = vmatpush1.msra.mxu0 0.0
  %96 = vmatprep.subr.mxu0 0.0
  %97 = vmatpush1.msra.mxu0 0.0
  %98 = vmatprep.subr.mxu0 0.0
  %99 = vmatpush1.msra.mxu0 0.0
  %100 = vmatprep.subr.mxu0 0.0
  %101 = vmatpush1.msra.mxu0 0.0
  %102 = vmatprep.subr.mxu0 0.0
  %103 = vmatpush1.msra.mxu0 0.0
  %104 = vmatprep.subr.mxu0 0.0
  %105 = vmatpush1.msra.mxu0 0.0
  %106 = vmatprep.subr.mxu0 0.0
  %107 = vmatpush1.msra.mxu0 0.0
  %108 = vmatprep.subr.mxu0 0.0
  %109 = vmatpush1.msra.mxu0 0.0
  %110 = vmatprep.subr.mxu0 0.0
  %111 = vmatpush1.msra.mxu0 0.0
  %112 = vmatprep.subr.mxu0 0.0
  %113 = vmatpush1.msra.mxu0 0.0
  %114 = vmatprep.subr.mxu0 0.0
  %115 = vmatpush1.msra.mxu0 0.0
  %116 = vmatprep.subr.mxu0 0.0
  %117 = vmatpush1.msra.mxu0 0.0
  %118 = vmatprep.subr.mxu0 0.0
  %119 = vmatpush1.msra.mxu0 0.0
  %120 = vmatprep.subr.mxu0 0.0
  %121 = vmatpush1.msra.mxu0 0.0
  %122 = vmatprep.subr.mxu0 0.0
  %123 = vmatpush1.msra.mxu0 0.0
  %124 = vmatprep.subr.mxu0 0.0
  %125 = vmatpush1.msra.mxu0 0.0
  %126 = vmatprep.subr.mxu0 0.0
  %127 = vmatpush1.msra.mxu0 0.0
  %128 = vmatprep.subr.mxu0 0.0
  %129 = vmatpush1.msra.mxu0 0.0
  %130 = vmatprep.subr.mxu0 0.0
  %131 = vmatpush1.msra.mxu0 0.0
  %132 = vmatprep.mubr.f32.mxu0 0.0
  %133 = vmatmul.mubr.f32.gmra.mrb[0].mxu0 %v50
  %v134 = vpop.f32.mrb[0].mxu0
  %v135 = vadd.f32 %v41, %v134
  %v136 = vpop.f32.mrb[0].mxu0
  %v137 = vadd.f32 %v41, %v136
  %138 = vmatprep.mubr.f32.mxu0 0.0
  %139 = vmatmul.mubr.f32.gmra.mrb[0].mxu0 %v53
  %v140 = vpop.f32.mrb[0].mxu0
  %v141 = vadd.f32 %v46, %v140
  %v142 = vpop.f32.mrb[0].mxu0
  %v143 = vadd.f32 %v46, %v142
  %144 = vdwg.mxu0
  %145 = vmatprep.subr.mxu0 %v19
  %146 = vmatpush1.msra.mxu0 %v18
  %147 = vmatprep.subr.mxu0 %v23
  %148 = vmatpush1.msra.mxu0 %v22
  %149 = vmatprep.subr.mxu0 %v27
  %150 = vmatpush1.msra.mxu0 %v26
  %151 = vmatprep.subr.mxu0 %v31
  %152 = vmatpush1.msra.mxu0 %v30
  %153 = vmatprep.subr.mxu0 %v66
  %154 = vmatpush1.msra.mxu0 %v63
  %155 = vmatprep.subr.mxu0 0.0
  %156 = vmatpush1.msra.mxu0 0.0
  %157 = vmatprep.subr.mxu0 0.0
  %158 = vmatpush1.msra.mxu0 0.0
  %159 = vmatprep.subr.mxu0 0.0
  %160 = vmatpush1.msra.mxu0 0.0
  %161 = vmatprep.subr.mxu0 0.0
  %162 = vmatpush1.msra.mxu0 0.0
  %163 = vmatprep.subr.mxu0 0.0
  %164 = vmatpush1.msra.mxu0 0.0
  %165 = vmatprep.subr.mxu0 0.0
  %166 = vmatpush1.msra.mxu0 0.0
  %167 = vmatprep.subr.mxu0 0.0
  %168 = vmatpush1.msra.mxu0 0.0
  %169 = vmatprep.subr.mxu0 0.0
  %170 = vmatpush1.msra.mxu0 0.0
  %171 = vmatprep.subr.mxu0 0.0
  %172 = vmatpush1.msra.mxu0 0.0
  %173 = vmatprep.subr.mxu0 0.0
  %174 = vmatpush1.msra.mxu0 0.0
  %175 = vmatprep.subr.mxu0 0.0
  %176 = vmatpush1.msra.mxu0 0.0
  %177 = vmatprep.subr.mxu0 0.0
  %178 = vmatpush1.msra.mxu0 0.0
  %179 = vmatprep.subr.mxu0 0.0
  %180 = vmatpush1.msra.mxu0 0.0
  %181 = vmatprep.subr.mxu0 0.0
  %182 = vmatpush1.msra.mxu0 0.0
  %183 = vmatprep.subr.mxu0 0.0
  %184 = vmatpush1.msra.mxu0 0.0
  %185 = vmatprep.subr.mxu0 0.0
  %186 = vmatpush1.msra.mxu0 0.0
  %187 = vmatprep.subr.mxu0 0.0
  %188 = vmatpush1.msra.mxu0 0.0
  %189 = vmatprep.subr.mxu0 0.0
  %190 = vmatpush1.msra.mxu0 0.0
  %191 = vmatprep.subr.mxu0 0.0
  %192 = vmatpush1.msra.mxu0 0.0
  %193 = vmatprep.subr.mxu0 0.0
  %194 = vmatpush1.msra.mxu0 0.0
  %195 = vmatprep.subr.mxu0 0.0
  %196 = vmatpush1.msra.mxu0 0.0
  %197 = vmatprep.subr.mxu0 0.0
  %198 = vmatpush1.msra.mxu0 0.0
  %199 = vmatprep.subr.mxu0 0.0
  %200 = vmatpush1.msra.mxu0 0.0
  %201 = vmatprep.subr.mxu0 0.0
  %202 = vmatpush1.msra.mxu0 0.0
  %203 = vmatprep.subr.mxu0 0.0
  %204 = vmatpush1.msra.mxu0 0.0
  %205 = vmatprep.subr.mxu0 0.0
  %206 = vmatpush1.msra.mxu0 0.0
  %207 = vmatprep.subr.mxu0 0.0
  %208 = vmatpush1.msra.mxu0 0.0
  %209 = vmatprep.mubr.f32.mxu0 0.0
  %210 = vmatmul.mubr.f32.gmra.mrb[0].mxu0 %v50
  %v211 = vpop.f32.mrb[0].mxu0
  %v212 = vadd.f32 %v41, %v211
  %v213 = vpop.f32.mrb[0].mxu0
  %v214 = vadd.f32 %v41, %v213
  %215 = vmatprep.mubr.f32.mxu0 0.0
  %216 = vmatmul.mubr.f32.gmra.mrb[0].mxu0 %v53
  %v217 = vpop.f32.mrb[0].mxu0
  %v218 = vadd.f32 %v46, %v217
  %v219 = vpop.f32.mrb[0].mxu0
  %v220 = vadd.f32 %v46, %v219
  %221 = vdwg.mxu0
  %vm222 = vcmp.ge.f32.partialorder %v135, 0.0
  %vm223 = vcmp.ge.f32.partialorder %v137, 0.0
  %vm224 = vcmp.ge.f32.partialorder %v212, 0.0
  %vm225 = vcmp.ge.f32.partialorder %v214, 0.0
  %vm226 = vcmp.ge.f32.partialorder %v141, 0.0
  %vm227 = vcmp.ge.f32.partialorder %v143, 0.0
  %vm228 = vcmp.ge.f32.partialorder %v218, 0.0
  %vm229 = vcmp.ge.f32.partialorder %v220, 0.0
  %v230 = vmul.f32 %v135, 0.1
  %v231 = vmul.f32 %v137, 0.1
  %v232 = vmul.f32 %v212, 0.1
  %v233 = vmul.f32 %v214, 0.1
  %v234 = vmul.f32 %v141, 0.1
  %v235 = vmul.f32 %v143, 0.1
  %v236 = vmul.f32 %v218, 0.1
  %v237 = vmul.f32 %v220, 0.1
  %v238 = vsel %vm222, %v135, %v230
  %v239 = vsel %vm223, %v137, %v231
  %v240 = vsel %vm224, %v212, %v232
  %v241 = vsel %vm225, %v214, %v233
  %v242 = vsel %vm226, %v141, %v234
  %v243 = vsel %vm227, %v143, %v235
  %v244 = vsel %vm228, %v218, %v236
  %v245 = vsel %vm229, %v220, %v237
  %246 = vst [vmem:[%s3] sm:$0xff] %v238
  %247 = vst [vmem:[%s3 + $0x8] sm:$0xff] %v239
  %248 = vst [vmem:[%s3 + $0x10] sm:$0xff] %v240
  %249 = vst [vmem:[%s3 + $0x18] sm:$0xff] %v241
  %250 = vst [vmem:[%s3 + $0x20] sm:$0xff] %v242
  %251 = vst [vmem:[%s3 + $0x28] sm:$0xff] %v243
  %252 = vst [vmem:[%s3 + $0x30] sm:$0xff] %v244
  %253 = vst [vmem:[%s3 + $0x38] sm:$0xff] %v245
  // Predicated region
  $region14: #{bimodel_forward.4} parent=0 // pred_check
    _
  $region15: #{bimodel_forward.4} parent=0 // pred_check_branch
    %255 = sbr.rel (0) target = $region17
  $region16: #{bimodel_forward.4} parent=0 // pred_region
    _
  $region17: #{bimodel_forward.4} parent=0 // pred_fallthru
    _
  // Predicated region
  $region18: #{bimodel_forward.4} parent=0 // pred_check
    _
  $region19: #{bimodel_forward.4} parent=0 // pred_check_branch
    %257 = sbr.rel (0) target = $region21
  $region20: #{bimodel_forward.4} parent=0 // pred_region
    _
  $region21: #{bimodel_forward.4} parent=0 // pred_fallthru
    _

// kernel: bimodel_forward.5
$region0: #{bimodel_forward.5}
  #allocation0 [shape = 'u32[]', space=smem, size = 0x4, offset = 0x4, fixed_abs, tag = 'smem constant byte address 0x4 - core index']
  #allocation1 [shape = 'u32[144,128]{1,0:T(1,128)}', space=vmem, size = 0x12000, scoped, tag = 'internal scratch']
  %s0 = inlined_call_operand.vmem [shape: f32[144,128], index: 0, kind: input, shape index: {}]
  %s1 = inlined_call_operand.vmem [shape: f32[16,144], index: 1, kind: input, shape index: {}]
  %s2 = inlined_call_operand.vmem [shape: f32[16,1], index: 2, kind: input, shape index: {}]
  %s3 = inlined_call_operand.vmem [shape: f32[8,128], index: 3, kind: input, shape index: {}]
  %s4 = inlined_call_operand.vmem [shape: f32[8,128], index: 4, kind: output, shape index: {0}]
  %s5 = inlined_call_operand.vmem [shape: f32[8,128], index: 5, kind: output, shape index: {1}]
  %s6 = inlined_call_operand.vmem [shape: f32[8,128], index: 6, kind: output, shape index: {2}]
  %s7 = inlined_call_operand.hbm [shape: f32[8,128], index: 7, kind: output, shape index: {3}]
  %s8 = inlined_call_operand.hbm [shape: f32[8,128], index: 8, kind: output, shape index: {4}]
  %9 = xla_tuple %s4, %s5, %s6, %s7, %s8
  %s10 = sld [smem:[#allocation0]]
  $region58: #{bimodel_forward.5} parent=0
    _
  %s12 = ssub.s32 1, %s10
  %s13 = scalar_select 0, %s12, %s10
  $region1: #{bimodel_forward.5} parent=0
    #allocation2 [shape = 'u8[4096]{0}', space=vmem, size = 0x1000, scoped, tag = 'output window, operand 3, single buffered']
    #allocation3 [shape = 's32[1]{0}', space=sflag, size = 0x4, scoped, tag = 'scoped memory for bimodel_forward.5']
    #allocation4 [shape = 'u8[4096]{0}', space=vmem, size = 0x1000, scoped, tag = 'output window, operand 4, single buffered']
    #allocation5 [shape = 's32[1]{0}', space=sflag, size = 0x4, scoped, tag = 'scoped memory for bimodel_forward.5']
    %14 = vsyncpa [#allocation3], 0
    %15 = vsyncpa [#allocation5], 0
    // Predicated region
    $region2: #{bimodel_forward.5} parent=1 // pred_check
      _
    $region3: #{bimodel_forward.5} parent=1 // pred_check_branch
      %17 = sbr.rel (0) target = $region5
    $region4: #{bimodel_forward.5} parent=1 // pred_region
      _
    $region5: #{bimodel_forward.5} parent=1 // pred_fallthru
      _
    // Predicated region
    $region6: #{bimodel_forward.5} parent=1 // pred_check
      _
    $region7: #{bimodel_forward.5} parent=1 // pred_check_branch
      %19 = sbr.rel (0) target = $region9
    $region8: #{bimodel_forward.5} parent=1 // pred_region
      _
    $region9: #{bimodel_forward.5} parent=1 // pred_fallthru
      _
    // Predicated region
    $region10: #{bimodel_forward.5} parent=1 // pred_check
      _
    $region11: #{bimodel_forward.5} parent=1 // pred_check_branch
      %21 = sbr.rel (0) target = $region13
    $region12: #{bimodel_forward.5} parent=1 // pred_region
      _
    $region13: #{bimodel_forward.5} parent=1 // pred_fallthru
      _
    // Predicated region
    $region14: #{bimodel_forward.5} parent=1 // pred_check
      _
    $region15: #{bimodel_forward.5} parent=1 // pred_check_branch
      %23 = sbr.rel (0) target = $region17
    $region16: #{bimodel_forward.5} parent=1 // pred_region
      _
    $region17: #{bimodel_forward.5} parent=1 // pred_fallthru
      _
    %v24 = vld [vmem:[%s1] sm:$0xff]
    %v25 = vld [vmem:[%s1 + $0x8] sm:$0xff]
    %v26 = vld [vmem:[%s1 + $0x10] sm:$0xff]
    %v27 = vld [vmem:[%s1 + $0x18] sm:$0xff]
    %v28 = vld [vmem:[%s0] sm:$0xff]
    %v29 = vld [vmem:[%s0 + $0x8] sm:$0xff]
    %v30 = vld [vmem:[%s0 + $0x10] sm:$0xff]
    %v31 = vld [vmem:[%s0 + $0x18] sm:$0xff]
    %v32 = vld [vmem:[%s0 + $0x20] sm:$0xff]
    %v33 = vld [vmem:[%s0 + $0x28] sm:$0xff]
    %v34 = vld [vmem:[%s0 + $0x30] sm:$0xff]
    %v35 = vld [vmem:[%s0 + $0x38] sm:$0xff]
    %v36 = vld [vmem:[%s0 + $0x40] sm:$0xff]
    %v37 = vld [vmem:[%s0 + $0x48] sm:$0xff]
    %v38 = vld [vmem:[%s0 + $0x50] sm:$0xff]
    %v39 = vld [vmem:[%s0 + $0x58] sm:$0xff]
    %v40 = vld [vmem:[%s0 + $0x60] sm:$0xff]
    %v41 = vld [vmem:[%s0 + $0x68] sm:$0xff]
    %v42 = vld [vmem:[%s0 + $0x70] sm:$0xff]
    %v43 = vld [vmem:[%s0 + $0x78] sm:$0xff]
    %v44 = vld [vmem:[%s0 + $0x80] sm:$0xff]
    %v45 = vld [vmem:[%s0 + $0x88] sm:$0xff]
    %v46 = vld [vmem:[%s2] sm:$0xff]
    %v47 = vld [vmem:[%s2 + $0x8] sm:$0xff]
    %49 = vset.pattern.permute.xlu0 0
    %50 = vperm.xlu0 %49, %v46
    %v51 = vpop.permute.xlu0 %50
    %54 = vset.pattern.permute.xlu0 0
    %55 = vperm.xlu0 %54, %v47
    %v56 = vpop.permute.xlu0 %55
    %vm58 = vcmask 130048
    %v60 = vsel %vm58, %v25, 0
    %v63 = vsel %vm58, %v27, 0
    %65 = vmatprep.subr.mxu0 0.0
    %66 = vmatpush1.msra.mxu0 %v28
    %67 = vmatprep.subr.mxu0 0.0
    %68 = vmatpush1.msra.mxu0 %v29
    %69 = vmatprep.subr.mxu0 0.0
    %70 = vmatpush1.msra.mxu0 %v30
    %71 = vmatprep.subr.mxu0 0.0
    %72 = vmatpush1.msra.mxu0 %v31
    %73 = vmatprep.subr.mxu0 0.0
    %74 = vmatpush1.msra.mxu0 %v32
    %75 = vmatprep.subr.mxu0 0.0
    %76 = vmatpush1.msra.mxu0 %v33
    %77 = vmatprep.subr.mxu0 0.0
    %78 = vmatpush1.msra.mxu0 %v34
    %79 = vmatprep.subr.mxu0 0.0
    %80 = vmatpush1.msra.mxu0 %v35
    %81 = vmatprep.subr.mxu0 0.0
    %82 = vmatpush1.msra.mxu0 %v36
    %83 = vmatprep.subr.mxu0 0.0
    %84 = vmatpush1.msra.mxu0 %v37
    %85 = vmatprep.subr.mxu0 0.0
    %86 = vmatpush1.msra.mxu0 %v38
    %87 = vmatprep.subr.mxu0 0.0
    %88 = vmatpush1.msra.mxu0 %v39
    %89 = vmatprep.subr.mxu0 0.0
    %90 = vmatpush1.msra.mxu0 %v40
    %91 = vmatprep.subr.mxu0 0.0
    %92 = vmatpush1.msra.mxu0 %v41
    %93 = vmatprep.subr.mxu0 0.0
    %94 = vmatpush1.msra.mxu0 %v42
    %95 = vmatprep.subr.mxu0 0.0
    %96 = vmatpush1.msra.mxu0 %v43
    %97 = vmatprep.subr.mxu0 0.0
    %98 = vmatpush1.msra.mxu0 %v44
    %99 = vmatprep.subr.mxu0 0.0
    %100 = vmatpush1.msra.mxu0 %v45
    %101 = vmatprep.subr.mxu0 0.0
    %102 = vmatpush1.msra.mxu0 0.0
    %103 = vmatprep.subr.mxu0 0.0
    %104 = vmatpush1.msra.mxu0 0.0
    %105 = vmatprep.subr.mxu0 0.0
    %106 = vmatpush1.msra.mxu0 0.0
    %107 = vmatprep.subr.mxu0 0.0
    %108 = vmatpush1.msra.mxu0 0.0
    %109 = vmatprep.subr.mxu0 0.0
    %110 = vmatpush1.msra.mxu0 0.0
    %111 = vmatprep.subr.mxu0 0.0
    %112 = vmatpush1.msra.mxu0 0.0
    %113 = vmatprep.subr.mxu0 0.0
    %114 = vmatpush1.msra.mxu0 0.0
    %115 = vmatprep.subr.mxu0 0.0
    %116 = vmatpush1.msra.mxu0 0.0
    %117 = vmatprep.subr.mxu0 0.0
    %118 = vmatpush1.msra.mxu0 0.0
    %119 = vmatprep.subr.mxu0 0.0
    %120 = vmatpush1.msra.mxu0 0.0
    %121 = vmatprep.subr.mxu0 0.0
    %122 = vmatpush1.msra.mxu0 0.0
    %123 = vmatprep.subr.mxu0 0.0
    %124 = vmatpush1.msra.mxu0 0.0
    %125 = vmatprep.subr.mxu0 0.0
    %126 = vmatpush1.msra.mxu0 0.0
    %127 = vmatprep.subr.mxu0 0.0
    %128 = vmatpush1.msra.mxu0 0.0
    %129 = vmatprep.mubr.f32.mxu0 %v60
    %130 = vmatmul.mubr.f32.gmra.mrb[0].mxu0 %v24
    %v131 = vpop.f32.mrb[0].mxu0
    %v132 = vadd.f32 %v51, %v131
    %v133 = vpop.f32.mrb[0].mxu0
    %134 = vmatprep.mubr.f32.mxu0 %v63
    %135 = vmatmul.mubr.f32.gmra.mrb[0].mxu0 %v26
    %v136 = vpop.f32.mrb[0].mxu0
    %v137 = vadd.f32 %v56, %v136
    %v138 = vpop.f32.mrb[0].mxu0
    %139 = vdwg.mxu0
    %v140 = vxor.u32 %v132, 2147483648
    %v141 = vmul.f32 %v140, 1.442695
    %v142 = vpow.pop %v141
    %v143 = vadd.f32 %v142, 1.0
    %v144 = vrcp.pop %v143
    %v145 = vmul.f32 1.0, %v144
    %v146 = vmax.f32 %v145, 1e-06
    %v147 = vmin.f32 %v146, 0.999999
    %v148 = vld [vmem:[%s3] sm:$0xff]
    %v149 = vmax.f32 %v148, 1e-06
    %v150 = vmin.f32 %v149, 0.999999
    %v151 = vsub.f32 1.0, %v147
    %v152 = vmul.f32 %v151, %v150
    %v153 = vsub.f32 1.0, %v150
    %v154 = vmul.f32 %v147, %v153
    %v155 = vrcp.pop %v154
    %v156 = vmul.f32 %v152, %v155
    %v157 = vmul.f32 %v156, %v156
    %v158 = vmul.f32 %v157, %v157
    %v159 = vadd.f32 %v158, 1.0
    %v160 = vrcp.pop %v159
    %v161 = vmul.f32 1.0, %v160
    %vm162 = vcmp.gt.f32.partialorder %v147, %v150
    %v163 = vsel %vm162, 1, 0
    %v164 = vcvt.s32.f32 %v163
    %165 = vst [vmem:[%s4] sm:$0xff] %v145
    %166 = vst [vmem:[%s5] sm:$0xff] %v161
    %v167 = vmul.f32 %v137, %v161
    %168 = vst [vmem:[%s6] sm:$0xff] %v167
    %169 = vst [vmem:[#allocation2] sm:$0xff] %v164
    %v170 = vmul.f32 %v137, %v164
    %171 = vst [vmem:[#allocation4] sm:$0xff] %v170
    // Predicated region
    $region18: #{bimodel_forward.5} parent=1 // pred_check
      _
    $region19: #{bimodel_forward.5} parent=1 // pred_check_branch
      %173 = sbr.rel (0) target = $region21
    $region20: #{bimodel_forward.5} parent=1 // pred_region
      _
    $region21: #{bimodel_forward.5} parent=1 // pred_fallthru
      _
    // Predicated region
    $region22: #{bimodel_forward.5} parent=1 // pred_check
      _
    $region23: #{bimodel_forward.5} parent=1 // pred_check_branch
      %175 = sbr.rel (0) target = $region25
    $region24: #{bimodel_forward.5} parent=1 // pred_region
      _
    $region25: #{bimodel_forward.5} parent=1 // pred_fallthru
      _
    // Predicated region
    $region26: #{bimodel_forward.5} parent=1 // pred_check
      _
    $region27: #{bimodel_forward.5} parent=1 // pred_check_branch
      %177 = sbr.rel (0) target = $region29
    $region28: #{bimodel_forward.5} parent=1 // pred_region
      _
    $region29: #{bimodel_forward.5} parent=1 // pred_fallthru
      _
    // Predicated region
    $region30: #{bimodel_forward.5} parent=1 // pred_check
      _
    $region31: #{bimodel_forward.5} parent=1 // pred_check_branch
      %179 = sbr.rel (0) target = $region33
    $region32: #{bimodel_forward.5} parent=1 // pred_region
      %s181 = ssub.s32 128, 128
      %182 = vsyncadd [#allocation3], %s181
      %s184 = sshll.u32 [#allocation2], 4
      %s185 = int_to_ptr.vmem [resolvable:$true] %s184
      %187 = dma.vmem_to_hbm [thread:$0]  %s185, 128, %s7, [#allocation3]
    $region33: #{bimodel_forward.5} parent=1 // pred_fallthru
      _
    // Predicated region
    $region34: #{bimodel_forward.5} parent=1 // pred_check
      _
    $region35: #{bimodel_forward.5} parent=1 // pred_check_branch
      %189 = sbr.rel (0) target = $region37
    $region36: #{bimodel_forward.5} parent=1 // pred_region
      %s191 = ssub.s32 128, 128
      %192 = vsyncadd [#allocation5], %s191
      %s194 = sshll.u32 [#allocation4], 4
      %s195 = int_to_ptr.vmem [resolvable:$true] %s194
      %197 = dma.vmem_to_hbm [thread:$0]  %s195, 128, %s8, [#allocation5]
    $region37: #{bimodel_forward.5} parent=1 // pred_fallthru
      _
    // Predicated region
    $region38: #{bimodel_forward.5} parent=1 // pred_check
      _
    $region39: #{bimodel_forward.5} parent=1 // pred_check_branch
      %199 = sbr.rel (0) target = $region41
    $region40: #{bimodel_forward.5} parent=1 // pred_region
      _
    $region41: #{bimodel_forward.5} parent=1 // pred_fallthru
      _
    // Predicated region
    $region42: #{bimodel_forward.5} parent=1 // pred_check
      _
    $region43: #{bimodel_forward.5} parent=1 // pred_check_branch
      %201 = sbr.rel (0) target = $region45
    $region44: #{bimodel_forward.5} parent=1 // pred_region
      _
    $region45: #{bimodel_forward.5} parent=1 // pred_fallthru
      _
    // Predicated region
    $region46: #{bimodel_forward.5} parent=1 // pred_check
      _
    $region47: #{bimodel_forward.5} parent=1 // pred_check_branch
      %203 = sbr.rel (0) target = $region49
    $region48: #{bimodel_forward.5} parent=1 // pred_region
      _
    $region49: #{bimodel_forward.5} parent=1 // pred_fallthru
      _
    // Predicated region
    $region50: #{bimodel_forward.5} parent=1 // pred_check
      _
    $region51: #{bimodel_forward.5} parent=1 // pred_check_branch
      %205 = sbr.rel (0) target = $region53
    $region52: #{bimodel_forward.5} parent=1 // pred_region
      %206 = dma.done [#allocation3], 128
    $region53: #{bimodel_forward.5} parent=1 // pred_fallthru
      _
    // Predicated region
    $region54: #{bimodel_forward.5} parent=1 // pred_check
      _
    $region55: #{bimodel_forward.5} parent=1 // pred_check_branch
      %208 = sbr.rel (0) target = $region57
    $region56: #{bimodel_forward.5} parent=1 // pred_region
      %209 = dma.done [#allocation5], 128
    $region57: #{bimodel_forward.5} parent=1 // pred_fallthru
      _
    %210 = vsyncpa [#allocation3], 1
    %211 = vsyncpa [#allocation5], 1

// kernel: bimodel_forward.6
$region0: #{bimodel_forward.6}
  #allocation0 [shape = 'u32[]', space=smem, size = 0x4, offset = 0x4, fixed_abs, tag = 'smem constant byte address 0x4 - core index']
  #allocation1 [shape = 'u32[144,128]{1,0:T(1,128)}', space=vmem, size = 0x12000, scoped, tag = 'internal scratch']
  %s0 = inlined_call_operand.vmem [shape: f32[72,128], index: 0, kind: input, shape index: {}]
  %s1 = inlined_call_operand.vmem [shape: f32[32,72], index: 1, kind: input, shape index: {}]
  %s2 = inlined_call_operand.vmem [shape: f32[32,1], index: 2, kind: input, shape index: {}]
  %s3 = inlined_call_operand.vmem [shape: f32[32,128], index: 3, kind: output, shape index: {}]
  %s4 = sld [smem:[#allocation0]]
  $region22: #{bimodel_forward.6} parent=0
    _
  %s6 = ssub.s32 1, %s4
  %s7 = scalar_select 0, %s6, %s4
  // Predicated region
  $region2: #{bimodel_forward.6} parent=0 // pred_check
    _
  $region3: #{bimodel_forward.6} parent=0 // pred_check_branch
    %9 = sbr.rel (0) target = $region5
  $region4: #{bimodel_forward.6} parent=0 // pred_region
    _
  $region5: #{bimodel_forward.6} parent=0 // pred_fallthru
    _
  // Predicated region
  $region6: #{bimodel_forward.6} parent=0 // pred_check
    _
  $region7: #{bimodel_forward.6} parent=0 // pred_check_branch
    %11 = sbr.rel (0) target = $region9
  $region8: #{bimodel_forward.6} parent=0 // pred_region
    _
  $region9: #{bimodel_forward.6} parent=0 // pred_fallthru
    _
  // Predicated region
  $region10: #{bimodel_forward.6} parent=0 // pred_check
    _
  $region11: #{bimodel_forward.6} parent=0 // pred_check_branch
    %13 = sbr.rel (0) target = $region13
  $region12: #{bimodel_forward.6} parent=0 // pred_region
    _
  $region13: #{bimodel_forward.6} parent=0 // pred_fallthru
    _
  %v14 = vld [vmem:[%s1] sm:$0xff]
  %v15 = vld [vmem:[%s1 + $0x8] sm:$0xff]
  %v16 = vld [vmem:[%s1 + $0x10] sm:$0xff]
  %v17 = vld [vmem:[%s1 + $0x18] sm:$0xff]
  %v18 = vld [vmem:[%s0] sm:$0xff]
  %v19 = vld [vmem:[%s0 + $0x8] sm:$0xff]
  %v20 = vld [vmem:[%s0 + $0x10] sm:$0xff]
  %v21 = vld [vmem:[%s0 + $0x18] sm:$0xff]
  %v22 = vld [vmem:[%s0 + $0x20] sm:$0xff]
  %v23 = vld [vmem:[%s0 + $0x28] sm:$0xff]
  %v24 = vld [vmem:[%s0 + $0x30] sm:$0xff]
  %v25 = vld [vmem:[%s0 + $0x38] sm:$0xff]
  %v26 = vld [vmem:[%s0 + $0x40] sm:$0xff]
  %v27 = vld [vmem:[%s2] sm:$0xff]
  %v28 = vld [vmem:[%s2 + $0x8] sm:$0xff]
  %v29 = vld [vmem:[%s2 + $0x10] sm:$0xff]
  %v30 = vld [vmem:[%s2 + $0x18] sm:$0xff]
  %32 = vset.pattern.permute.xlu0 0
  %33 = vperm.xlu0 %32, %v27
  %v34 = vpop.permute.xlu0 %33
  %37 = vset.pattern.permute.xlu0 0
  %38 = vperm.xlu0 %37, %v28
  %v39 = vpop.permute.xlu0 %38
  %42 = vset.pattern.permute.xlu0 0
  %43 = vperm.xlu0 %42, %v29
  %v44 = vpop.permute.xlu0 %43
  %47 = vset.pattern.permute.xlu0 0
  %48 = vperm.xlu0 %47, %v30
  %v49 = vpop.permute.xlu0 %48
  %vm51 = vcmask 588800
  %v53 = vsel %vm51, %v14, 0
  %v56 = vsel %vm51, %v15, 0
  %v59 = vsel %vm51, %v16, 0
  %v62 = vsel %vm51, %v17, 0
  %64 = vmatprep.subr.mxu0 0.0
  %65 = vmatpush1.msra.mxu0 %v18
  %66 = vmatprep.subr.mxu0 0.0
  %67 = vmatpush1.msra.mxu0 %v19
  %68 = vmatprep.subr.mxu0 0.0
  %69 = vmatpush1.msra.mxu0 %v20
  %70 = vmatprep.subr.mxu0 0.0
  %71 = vmatpush1.msra.mxu0 %v21
  %72 = vmatprep.subr.mxu0 0.0
  %73 = vmatpush1.msra.mxu0 %v22
  %74 = vmatprep.subr.mxu0 0.0
  %75 = vmatpush1.msra.mxu0 %v23
  %76 = vmatprep.subr.mxu0 0.0
  %77 = vmatpush1.msra.mxu0 %v24
  %78 = vmatprep.subr.mxu0 0.0
  %79 = vmatpush1.msra.mxu0 %v25
  %80 = vmatprep.subr.mxu0 0.0
  %81 = vmatpush1.msra.mxu0 %v26
  %82 = vmatprep.subr.mxu0 0.0
  %83 = vmatpush1.msra.mxu0 0.0
  %84 = vmatprep.subr.mxu0 0.0
  %85 = vmatpush1.msra.mxu0 0.0
  %86 = vmatprep.subr.mxu0 0.0
  %87 = vmatpush1.msra.mxu0 0.0
  %88 = vmatprep.subr.mxu0 0.0
  %89 = vmatpush1.msra.mxu0 0.0
  %90 = vmatprep.subr.mxu0 0.0
  %91 = vmatpush1.msra.mxu0 0.0
  %92 = vmatprep.subr.mxu0 0.0
  %93 = vmatpush1.msra.mxu0 0.0
  %94 = vmatprep.subr.mxu0 0.0
  %95 = vmatpush1.msra.mxu0 0.0
  %96 = vmatprep.subr.mxu0 0.0
  %97 = vmatpush1.msra.mxu0 0.0
  %98 = vmatprep.subr.mxu0 0.0
  %99 = vmatpush1.msra.mxu0 0.0
  %100 = vmatprep.subr.mxu0 0.0
  %101 = vmatpush1.msra.mxu0 0.0
  %102 = vmatprep.subr.mxu0 0.0
  %103 = vmatpush1.msra.mxu0 0.0
  %104 = vmatprep.subr.mxu0 0.0
  %105 = vmatpush1.msra.mxu0 0.0
  %106 = vmatprep.subr.mxu0 0.0
  %107 = vmatpush1.msra.mxu0 0.0
  %108 = vmatprep.subr.mxu0 0.0
  %109 = vmatpush1.msra.mxu0 0.0
  %110 = vmatprep.subr.mxu0 0.0
  %111 = vmatpush1.msra.mxu0 0.0
  %112 = vmatprep.subr.mxu0 0.0
  %113 = vmatpush1.msra.mxu0 0.0
  %114 = vmatprep.subr.mxu0 0.0
  %115 = vmatpush1.msra.mxu0 0.0
  %116 = vmatprep.subr.mxu0 0.0
  %117 = vmatpush1.msra.mxu0 0.0
  %118 = vmatprep.subr.mxu0 0.0
  %119 = vmatpush1.msra.mxu0 0.0
  %120 = vmatprep.subr.mxu0 0.0
  %121 = vmatpush1.msra.mxu0 0.0
  %122 = vmatprep.subr.mxu0 0.0
  %123 = vmatpush1.msra.mxu0 0.0
  %124 = vmatprep.subr.mxu0 0.0
  %125 = vmatpush1.msra.mxu0 0.0
  %126 = vmatprep.subr.mxu0 0.0
  %127 = vmatpush1.msra.mxu0 0.0
  %128 = vmatprep.mubr.f32.mxu0 0.0
  %129 = vmatmul.mubr.f32.gmra.mrb[0].mxu0 %v53
  %v130 = vpop.f32.mrb[0].mxu0
  %v131 = vadd.f32 %v34, %v130
  %v132 = vpop.f32.mrb[0].mxu0
  %133 = vmatprep.mubr.f32.mxu0 0.0
  %134 = vmatmul.mubr.f32.gmra.mrb[0].mxu0 %v56
  %v135 = vpop.f32.mrb[0].mxu0
  %v136 = vadd.f32 %v39, %v135
  %v137 = vpop.f32.mrb[0].mxu0
  %138 = vmatprep.mubr.f32.mxu0 0.0
  %139 = vmatmul.mubr.f32.gmra.mrb[0].mxu0 %v59
  %v140 = vpop.f32.mrb[0].mxu0
  %v141 = vadd.f32 %v44, %v140
  %v142 = vpop.f32.mrb[0].mxu0
  %143 = vmatprep.mubr.f32.mxu0 0.0
  %144 = vmatmul.mubr.f32.gmra.mrb[0].mxu0 %v62
  %v145 = vpop.f32.mrb[0].mxu0
  %v146 = vadd.f32 %v49, %v145
  %v147 = vpop.f32.mrb[0].mxu0
  %148 = vdwg.mxu0
  %vm149 = vcmp.ge.f32.partialorder %v131, 0.0
  %vm150 = vcmp.ge.f32.partialorder %v136, 0.0
  %vm151 = vcmp.ge.f32.partialorder %v141, 0.0
  %vm152 = vcmp.ge.f32.partialorder %v146, 0.0
  %v153 = vmul.f32 %v131, 0.1
  %v154 = vmul.f32 %v136, 0.1
  %v155 = vmul.f32 %v141, 0.1
  %v156 = vmul.f32 %v146, 0.1
  %v157 = vsel %vm149, %v131, %v153
  %v158 = vsel %vm150, %v136, %v154
  %v159 = vsel %vm151, %v141, %v155
  %v160 = vsel %vm152, %v146, %v156
  %161 = vst [vmem:[%s3] sm:$0xff] %v157
  %162 = vst [vmem:[%s3 + $0x8] sm:$0xff] %v158
  %163 = vst [vmem:[%s3 + $0x10] sm:$0xff] %v159
  %164 = vst [vmem:[%s3 + $0x18] sm:$0xff] %v160
  // Predicated region
  $region14: #{bimodel_forward.6} parent=0 // pred_check
    _
  $region15: #{bimodel_forward.6} parent=0 // pred_check_branch
    %166 = sbr.rel (0) target = $region17
  $region16: #{bimodel_forward.6} parent=0 // pred_region
    _
  $region17: #{bimodel_forward.6} parent=0 // pred_fallthru
    _
  // Predicated region
  $region18: #{bimodel_forward.6} parent=0 // pred_check
    _
  $region19: #{bimodel_forward.6} parent=0 // pred_check_branch
    %168 = sbr.rel (0) target = $region21
  $region20: #{bimodel_forward.6} parent=0 // pred_region
    _
  $region21: #{bimodel_forward.6} parent=0 // pred_fallthru
    _

// kernel: bimodel_forward.7
$region0: #{bimodel_forward.7}
  #allocation0 [shape = 'u32[]', space=smem, size = 0x4, offset = 0x4, fixed_abs, tag = 'smem constant byte address 0x4 - core index']
  #allocation1 [shape = 'u32[144,128]{1,0:T(1,128)}', space=vmem, size = 0x12000, scoped, tag = 'internal scratch']
  %s0 = inlined_call_operand.vmem [shape: f32[144,512], index: 0, kind: input, shape index: {}]
  %s1 = inlined_call_operand.vmem [shape: f32[144,512], index: 1, kind: input, shape index: {}]
  %s2 = inlined_call_operand.vmem [shape: f32[4,144], index: 2, kind: input, shape index: {}]
  %s3 = inlined_call_operand.vmem [shape: f32[4,144], index: 3, kind: input, shape index: {}]
  %s4 = inlined_call_operand.vmem [shape: f32[4,1], index: 4, kind: input, shape index: {}]
  %s5 = inlined_call_operand.vmem [shape: f32[4,1], index: 5, kind: input, shape index: {}]
  %s6 = inlined_call_operand.vmem [shape: f32[4,512], index: 6, kind: output, shape index: {0}]
  %s7 = inlined_call_operand.vmem [shape: f32[4,512], index: 7, kind: output, shape index: {1}]
  %8 = xla_tuple %s6, %s7
  %s9 = sld [smem:[#allocation0]]
  $region42: #{bimodel_forward.7} parent=0
    _
  %s11 = ssub.s32 1, %s9
  %s12 = scalar_select 0, %s11, %s9
  // Predicated region
  $region2: #{bimodel_forward.7} parent=0 // pred_check
    _
  $region3: #{bimodel_forward.7} parent=0 // pred_check_branch
    %14 = sbr.rel (0) target = $region5
  $region4: #{bimodel_forward.7} parent=0 // pred_region
    _
  $region5: #{bimodel_forward.7} parent=0 // pred_fallthru
    _
  // Predicated region
  $region6: #{bimodel_forward.7} parent=0 // pred_check
    _
  $region7: #{bimodel_forward.7} parent=0 // pred_check_branch
    %16 = sbr.rel (0) target = $region9
  $region8: #{bimodel_forward.7} parent=0 // pred_region
    _
  $region9: #{bimodel_forward.7} parent=0 // pred_fallthru
    _
  // Predicated region
  $region10: #{bimodel_forward.7} parent=0 // pred_check
    _
  $region11: #{bimodel_forward.7} parent=0 // pred_check_branch
    %18 = sbr.rel (0) target = $region13
  $region12: #{bimodel_forward.7} parent=0 // pred_region
    _
  $region13: #{bimodel_forward.7} parent=0 // pred_fallthru
    _
  // Predicated region
  $region14: #{bimodel_forward.7} parent=0 // pred_check
    _
  $region15: #{bimodel_forward.7} parent=0 // pred_check_branch
    %20 = sbr.rel (0) target = $region17
  $region16: #{bimodel_forward.7} parent=0 // pred_region
    _
  $region17: #{bimodel_forward.7} parent=0 // pred_fallthru
    _
  // Predicated region
  $region18: #{bimodel_forward.7} parent=0 // pred_check
    _
  $region19: #{bimodel_forward.7} parent=0 // pred_check_branch
    %22 = sbr.rel (0) target = $region21
  $region20: #{bimodel_forward.7} parent=0 // pred_region
    _
  $region21: #{bimodel_forward.7} parent=0 // pred_fallthru
    _
  // Predicated region
  $region22: #{bimodel_forward.7} parent=0 // pred_check
    _
  $region23: #{bimodel_forward.7} parent=0 // pred_check_branch
    %24 = sbr.rel (0) target = $region25
  $region24: #{bimodel_forward.7} parent=0 // pred_region
    _
  $region25: #{bimodel_forward.7} parent=0 // pred_fallthru
    _
  %v25 = vld [vmem:[%s2] sm:$0xff]
  %v26 = vld [vmem:[%s0] sm:$0xff]
  %v27 = vld [vmem:[%s0 + $0x8] sm:$0xff]
  %v28 = vld [vmem:[%s0 + $0x10] sm:$0xff]
  %v29 = vld [vmem:[%s0 + $0x18] sm:$0xff]
  %v30 = vld [vmem:[%s0 + $0x20] sm:$0xff]
  %v31 = vld [vmem:[%s0 + $0x28] sm:$0xff]
  %v32 = vld [vmem:[%s0 + $0x30] sm:$0xff]
  %v33 = vld [vmem:[%s0 + $0x38] sm:$0xff]
  %v34 = vld [vmem:[%s0 + $0x40] sm:$0xff]
  %v35 = vld [vmem:[%s0 + $0x48] sm:$0xff]
  %v36 = vld [vmem:[%s0 + $0x50] sm:$0xff]
  %v37 = vld [vmem:[%s0 + $0x58] sm:$0xff]
  %v38 = vld [vmem:[%s0 + $0x60] sm:$0xff]
  %v39 = vld [vmem:[%s0 + $0x68] sm:$0xff]
  %v40 = vld [vmem:[%s0 + $0x70] sm:$0xff]
  %v41 = vld [vmem:[%s0 + $0x78] sm:$0xff]
  %v42 = vld [vmem:[%s0 + $0x80] sm:$0xff]
  %v43 = vld [vmem:[%s0 + $0x88] sm:$0xff]
  %v44 = vld [vmem:[%s0 + $0x90] sm:$0xff]
  %v45 = vld [vmem:[%s0 + $0x98] sm:$0xff]
  %v46 = vld [vmem:[%s0 + $0xa0] sm:$0xff]
  %v47 = vld [vmem:[%s0 + $0xa8] sm:$0xff]
  %v48 = vld [vmem:[%s0 + $0xb0] sm:$0xff]
  %v49 = vld [vmem:[%s0 + $0xb8] sm:$0xff]
  %v50 = vld [vmem:[%s0 + $0xc0] sm:$0xff]
  %v51 = vld [vmem:[%s0 + $0xc8] sm:$0xff]
  %v52 = vld [vmem:[%s0 + $0xd0] sm:$0xff]
  %v53 = vld [vmem:[%s0 + $0xd8] sm:$0xff]
  %v54 = vld [vmem:[%s0 + $0xe0] sm:$0xff]
  %v55 = vld [vmem:[%s0 + $0xe8] sm:$0xff]
  %v56 = vld [vmem:[%s0 + $0xf0] sm:$0xff]
  %v57 = vld [vmem:[%s0 + $0xf8] sm:$0xff]
  %v58 = vld [vmem:[%s0 + $0x100] sm:$0xff]
  %v59 = vld [vmem:[%s0 + $0x108] sm:$0xff]
  %v60 = vld [vmem:[%s0 + $0x110] sm:$0xff]
  %v61 = vld [vmem:[%s0 + $0x118] sm:$0xff]
  %v62 = vld [vmem:[%s0 + $0x120] sm:$0xff]
  %v63 = vld [vmem:[%s0 + $0x128] sm:$0xff]
  %v64 = vld [vmem:[%s0 + $0x130] sm:$0xff]
  %v65 = vld [vmem:[%s0 + $0x138] sm:$0xff]
  %v66 = vld [vmem:[%s0 + $0x140] sm:$0xff]
  %v67 = vld [vmem:[%s0 + $0x148] sm:$0xff]
  %v68 = vld [vmem:[%s0 + $0x150] sm:$0xff]
  %v69 = vld [vmem:[%s0 + $0x158] sm:$0xff]
  %v70 = vld [vmem:[%s0 + $0x160] sm:$0xff]
  %v71 = vld [vmem:[%s0 + $0x168] sm:$0xff]
  %v72 = vld [vmem:[%s0 + $0x170] sm:$0xff]
  %v73 = vld [vmem:[%s0 + $0x178] sm:$0xff]
  %v74 = vld [vmem:[%s0 + $0x180] sm:$0xff]
  %v75 = vld [vmem:[%s0 + $0x188] sm:$0xff]
  %v76 = vld [vmem:[%s0 + $0x190] sm:$0xff]
  %v77 = vld [vmem:[%s0 + $0x198] sm:$0xff]
  %v78 = vld [vmem:[%s0 + $0x1a0] sm:$0xff]
  %v79 = vld [vmem:[%s0 + $0x1a8] sm:$0xff]
  %v80 = vld [vmem:[%s0 + $0x1b0] sm:$0xff]
  %v81 = vld [vmem:[%s0 + $0x1b8] sm:$0xff]
  %v82 = vld [vmem:[%s0 + $0x1c0] sm:$0xff]
  %v83 = vld [vmem:[%s0 + $0x1c8] sm:$0xff]
  %v84 = vld [vmem:[%s0 + $0x1d0] sm:$0xff]
  %v85 = vld [vmem:[%s0 + $0x1d8] sm:$0xff]
  %v86 = vld [vmem:[%s0 + $0x1e0] sm:$0xff]
  %v87 = vld [vmem:[%s0 + $0x1e8] sm:$0xff]
  %v88 = vld [vmem:[%s0 + $0x1f0] sm:$0xff]
  %v89 = vld [vmem:[%s0 + $0x1f8] sm:$0xff]
  %v90 = vld [vmem:[%s0 + $0x200] sm:$0xff]
  %v91 = vld [vmem:[%s0 + $0x208] sm:$0xff]
  %v92 = vld [vmem:[%s0 + $0x210] sm:$0xff]
  %v93 = vld [vmem:[%s0 + $0x218] sm:$0xff]
  %v94 = vld [vmem:[%s0 + $0x220] sm:$0xff]
  %v95 = vld [vmem:[%s0 + $0x228] sm:$0xff]
  %v96 = vld [vmem:[%s0 + $0x230] sm:$0xff]
  %v97 = vld [vmem:[%s0 + $0x238] sm:$0xff]
  %v98 = vld [vmem:[%s4] sm:$0xf]
  %100 = vset.pattern.permute.xlu0 0
  %101 = vperm.xlu0 %100, %v98
  %v102 = vpop.permute.xlu0 %101
  %v105 = vcombine.high %v25, %v25
  %vm106 = vcmask 130048
  %v107 = vsel %vm106, %v105, 0
  %109 = vmatprep.subr.mxu0 %v27
  %110 = vmatpush1.msra.mxu0 %v26
  %111 = vmatprep.subr.mxu0 %v31
  %112 = vmatpush1.msra.mxu0 %v30
  %113 = vmatprep.subr.mxu0 %v35
  %114 = vmatpush1.msra.mxu0 %v34
  %115 = vmatprep.subr.mxu0 %v39
  %116 = vmatpush1.msra.mxu0 %v38
  %117 = vmatprep.subr.mxu0 %v43
  %118 = vmatpush1.msra.mxu0 %v42
  %119 = vmatprep.subr.mxu0 %v47
  %120 = vmatpush1.msra.mxu0 %v46
  %121 = vmatprep.subr.mxu0 %v51
  %122 = vmatpush1.msra.mxu0 %v50
  %123 = vmatprep.subr.mxu0 %v55
  %124 = vmatpush1.msra.mxu0 %v54
  %125 = vmatprep.subr.mxu0 %v59
  %126 = vmatpush1.msra.mxu0 %v58
  %127 = vmatprep.subr.mxu0 %v63
  %128 = vmatpush1.msra.mxu0 %v62
  %129 = vmatprep.subr.mxu0 %v67
  %130 = vmatpush1.msra.mxu0 %v66
  %131 = vmatprep.subr.mxu0 %v71
  %132 = vmatpush1.msra.mxu0 %v70
  %133 = vmatprep.subr.mxu0 %v75
  %134 = vmatpush1.msra.mxu0 %v74
  %135 = vmatprep.subr.mxu0 %v79
  %136 = vmatpush1.msra.mxu0 %v78
  %137 = vmatprep.subr.mxu0 %v83
  %138 = vmatpush1.msra.mxu0 %v82
  %139 = vmatprep.subr.mxu0 %v87
  %140 = vmatpush1.msra.mxu0 %v86
  %141 = vmatprep.subr.mxu0 %v91
  %142 = vmatpush1.msra.mxu0 %v90
  %143 = vmatprep.subr.mxu0 %v95
  %144 = vmatpush1.msra.mxu0 %v94
  %145 = vmatprep.subr.mxu0 0.0
  %146 = vmatpush1.msra.mxu0 0.0
  %147 = vmatprep.subr.mxu0 0.0
  %148 = vmatpush1.msra.mxu0 0.0
  %149 = vmatprep.subr.mxu0 0.0
  %150 = vmatpush1.msra.mxu0 0.0
  %151 = vmatprep.subr.mxu0 0.0
  %152 = vmatpush1.msra.mxu0 0.0
  %153 = vmatprep.subr.mxu0 0.0
  %154 = vmatpush1.msra.mxu0 0.0
  %155 = vmatprep.subr.mxu0 0.0
  %156 = vmatpush1.msra.mxu0 0.0
  %157 = vmatprep.subr.mxu0 0.0
  %158 = vmatpush1.msra.mxu0 0.0
  %159 = vmatprep.subr.mxu0 0.0
  %160 = vmatpush1.msra.mxu0 0.0
  %161 = vmatprep.subr.mxu0 0.0
  %162 = vmatpush1.msra.mxu0 0.0
  %163 = vmatprep.subr.mxu0 0.0
  %164 = vmatpush1.msra.mxu0 0.0
  %165 = vmatprep.subr.mxu0 0.0
  %166 = vmatpush1.msra.mxu0 0.0
  %167 = vmatprep.subr.mxu0 0.0
  %168 = vmatpush1.msra.mxu0 0.0
  %169 = vmatprep.subr.mxu0 0.0
  %170 = vmatpush1.msra.mxu0 0.0
  %171 = vmatprep.subr.mxu0 0.0
  %172 = vmatpush1.msra.mxu0 0.0
  %173 = vmatprep.mubr.f32.mxu0 %v107
  %174 = vmatmul.mubr.f32.gmra.mrb[0].mxu0 %v25
  %v175 = vpop.f32.mrb[0].mxu0
  %v176 = vadd.f32 %v102, %v175
  %v177 = vpop.f32.mrb[0].mxu0
  %v178 = vadd.f32 %v102, %v177
  %179 = vdwg.mxu0
  %180 = vmatprep.subr.mxu0 %v29
  %181 = vmatpush1.msra.mxu0 %v28
  %182 = vmatprep.subr.mxu0 %v33
  %183 = vmatpush1.msra.mxu0 %v32
  %184 = vmatprep.subr.mxu0 %v37
  %185 = vmatpush1.msra.mxu0 %v36
  %186 = vmatprep.subr.mxu0 %v41
  %187 = vmatpush1.msra.mxu0 %v40
  %188 = vmatprep.subr.mxu0 %v45
  %189 = vmatpush1.msra.mxu0 %v44
  %190 = vmatprep.subr.mxu0 %v49
  %191 = vmatpush1.msra.mxu0 %v48
  %192 = vmatprep.subr.mxu0 %v53
  %193 = vmatpush1.msra.mxu0 %v52
  %194 = vmatprep.subr.mxu0 %v57
  %195 = vmatpush1.msra.mxu0 %v56
  %196 = vmatprep.subr.mxu0 %v61
  %197 = vmatpush1.msra.mxu0 %v60
  %198 = vmatprep.subr.mxu0 %v65
  %199 = vmatpush1.msra.mxu0 %v64
  %200 = vmatprep.subr.mxu0 %v69
  %201 = vmatpush1.msra.mxu0 %v68
  %202 = vmatprep.subr.mxu0 %v73
  %203 = vmatpush1.msra.mxu0 %v72
  %204 = vmatprep.subr.mxu0 %v77
  %205 = vmatpush1.msra.mxu0 %v76
  %206 = vmatprep.subr.mxu0 %v81
  %207 = vmatpush1.msra.mxu0 %v80
  %208 = vmatprep.subr.mxu0 %v85
  %209 = vmatpush1.msra.mxu0 %v84
  %210 = vmatprep.subr.mxu0 %v89
  %211 = vmatpush1.msra.mxu0 %v88
  %212 = vmatprep.subr.mxu0 %v93
  %213 = vmatpush1.msra.mxu0 %v92
  %214 = vmatprep.subr.mxu0 %v97
  %215 = vmatpush1.msra.mxu0 %v96
  %216 = vmatprep.subr.mxu0 0.0
  %217 = vmatpush1.msra.mxu0 0.0
  %218 = vmatprep.subr.mxu0 0.0
  %219 = vmatpush1.msra.mxu0 0.0
  %220 = vmatprep.subr.mxu0 0.0
  %221 = vmatpush1.msra.mxu0 0.0
  %222 = vmatprep.subr.mxu0 0.0
  %223 = vmatpush1.msra.mxu0 0.0
  %224 = vmatprep.subr.mxu0 0.0
  %225 = vmatpush1.msra.mxu0 0.0
  %226 = vmatprep.subr.mxu0 0.0
  %227 = vmatpush1.msra.mxu0 0.0
  %228 = vmatprep.subr.mxu0 0.0
  %229 = vmatpush1.msra.mxu0 0.0
  %230 = vmatprep.subr.mxu0 0.0
  %231 = vmatpush1.msra.mxu0 0.0
  %232 = vmatprep.subr.mxu0 0.0
  %233 = vmatpush1.msra.mxu0 0.0
  %234 = vmatprep.subr.mxu0 0.0
  %235 = vmatpush1.msra.mxu0 0.0
  %236 = vmatprep.subr.mxu0 0.0
  %237 = vmatpush1.msra.mxu0 0.0
  %238 = vmatprep.subr.mxu0 0.0
  %239 = vmatpush1.msra.mxu0 0.0
  %240 = vmatprep.subr.mxu0 0.0
  %241 = vmatpush1.msra.mxu0 0.0
  %242 = vmatprep.subr.mxu0 0.0
  %243 = vmatpush1.msra.mxu0 0.0
  %244 = vmatprep.mubr.f32.mxu0 %v107
  %245 = vmatmul.mubr.f32.gmra.mrb[0].mxu0 %v25
  %v246 = vpop.f32.mrb[0].mxu0
  %v247 = vadd.f32 %v102, %v246
  %v248 = vpop.f32.mrb[0].mxu0
  %v249 = vadd.f32 %v102, %v248
  %250 = vdwg.mxu0
  %v255 = vcombine.low %v176, %v178
  %v256 = vcombine.low %v247, %v249
  %259 = vst [vmem:[%s6] sm:$0xff] %v255
  %260 = vst [vmem:[%s6 + $0x8] sm:$0xff] %v256
  %v261 = vld [vmem:[%s3] sm:$0xff]
  %v262 = vld [vmem:[%s1] sm:$0xff]
  %v263 = vld [vmem:[%s1 + $0x8] sm:$0xff]
  %v264 = vld [vmem:[%s1 + $0x10] sm:$0xff]
  %v265 = vld [vmem:[%s1 + $0x18] sm:$0xff]
  %v266 = vld [vmem:[%s1 + $0x20] sm:$0xff]
  %v267 = vld [vmem:[%s1 + $0x28] sm:$0xff]
  %v268 = vld [vmem:[%s1 + $0x30] sm:$0xff]
  %v269 = vld [vmem:[%s1 + $0x38] sm:$0xff]
  %v270 = vld [vmem:[%s1 + $0x40] sm:$0xff]
  %v271 = vld [vmem:[%s1 + $0x48] sm:$0xff]
  %v272 = vld [vmem:[%s1 + $0x50] sm:$0xff]
  %v273 = vld [vmem:[%s1 + $0x58] sm:$0xff]
  %v274 = vld [vmem:[%s1 + $0x60] sm:$0xff]
  %v275 = vld [vmem:[%s1 + $0x68] sm:$0xff]
  %v276 = vld [vmem:[%s1 + $0x70] sm:$0xff]
  %v277 = vld [vmem:[%s1 + $0x78] sm:$0xff]
  %v278 = vld [vmem:[%s1 + $0x80] sm:$0xff]
  %v279 = vld [vmem:[%s1 + $0x88] sm:$0xff]
  %v280 = vld [vmem:[%s1 + $0x90] sm:$0xff]
  %v281 = vld [vmem:[%s1 + $0x98] sm:$0xff]
  %v282 = vld [vmem:[%s1 + $0xa0] sm:$0xff]
  %v283 = vld [vmem:[%s1 + $0xa8] sm:$0xff]
  %v284 = vld [vmem:[%s1 + $0xb0] sm:$0xff]
  %v285 = vld [vmem:[%s1 + $0xb8] sm:$0xff]
  %v286 = vld [vmem:[%s1 + $0xc0] sm:$0xff]
  %v287 = vld [vmem:[%s1 + $0xc8] sm:$0xff]
  %v288 = vld [vmem:[%s1 + $0xd0] sm:$0xff]
  %v289 = vld [vmem:[%s1 + $0xd8] sm:$0xff]
  %v290 = vld [vmem:[%s1 + $0xe0] sm:$0xff]
  %v291 = vld [vmem:[%s1 + $0xe8] sm:$0xff]
  %v292 = vld [vmem:[%s1 + $0xf0] sm:$0xff]
  %v293 = vld [vmem:[%s1 + $0xf8] sm:$0xff]
  %v294 = vld [vmem:[%s1 + $0x100] sm:$0xff]
  %v295 = vld [vmem:[%s1 + $0x108] sm:$0xff]
  %v296 = vld [vmem:[%s1 + $0x110] sm:$0xff]
  %v297 = vld [vmem:[%s1 + $0x118] sm:$0xff]
  %v298 = vld [vmem:[%s1 + $0x120] sm:$0xff]
  %v299 = vld [vmem:[%s1 + $0x128] sm:$0xff]
  %v300 = vld [vmem:[%s1 + $0x130] sm:$0xff]
  %v301 = vld [vmem:[%s1 + $0x138] sm:$0xff]
  %v302 = vld [vmem:[%s1 + $0x140] sm:$0xff]
  %v303 = vld [vmem:[%s1 + $0x148] sm:$0xff]
  %v304 = vld [vmem:[%s1 + $0x150] sm:$0xff]
  %v305 = vld [vmem:[%s1 + $0x158] sm:$0xff]
  %v306 = vld [vmem:[%s1 + $0x160] sm:$0xff]
  %v307 = vld [vmem:[%s1 + $0x168] sm:$0xff]
  %v308 = vld [vmem:[%s1 + $0x170] sm:$0xff]
  %v309 = vld [vmem:[%s1 + $0x178] sm:$0xff]
  %v310 = vld [vmem:[%s1 + $0x180] sm:$0xff]
  %v311 = vld [vmem:[%s1 + $0x188] sm:$0xff]
  %v312 = vld [vmem:[%s1 + $0x190] sm:$0xff]
  %v313 = vld [vmem:[%s1 + $0x198] sm:$0xff]
  %v314 = vld [vmem:[%s1 + $0x1a0] sm:$0xff]
  %v315 = vld [vmem:[%s1 + $0x1a8] sm:$0xff]
  %v316 = vld [vmem:[%s1 + $0x1b0] sm:$0xff]
  %v317 = vld [vmem:[%s1 + $0x1b8] sm:$0xff]
  %v318 = vld [vmem:[%s1 + $0x1c0] sm:$0xff]
  %v319 = vld [vmem:[%s1 + $0x1c8] sm:$0xff]
  %v320 = vld [vmem:[%s1 + $0x1d0] sm:$0xff]
  %v321 = vld [vmem:[%s1 + $0x1d8] sm:$0xff]
  %v322 = vld [vmem:[%s1 + $0x1e0] sm:$0xff]
  %v323 = vld [vmem:[%s1 + $0x1e8] sm:$0xff]
  %v324 = vld [vmem:[%s1 + $0x1f0] sm:$0xff]
  %v325 = vld [vmem:[%s1 + $0x1f8] sm:$0xff]
  %v326 = vld [vmem:[%s1 + $0x200] sm:$0xff]
  %v327 = vld [vmem:[%s1 + $0x208] sm:$0xff]
  %v328 = vld [vmem:[%s1 + $0x210] sm:$0xff]
  %v329 = vld [vmem:[%s1 + $0x218] sm:$0xff]
  %v330 = vld [vmem:[%s1 + $0x220] sm:$0xff]
  %v331 = vld [vmem:[%s1 + $0x228] sm:$0xff]
  %v332 = vld [vmem:[%s1 + $0x230] sm:$0xff]
  %v333 = vld [vmem:[%s1 + $0x238] sm:$0xff]
  %v334 = vld [vmem:[%s5] sm:$0xf]
  %336 = vset.pattern.permute.xlu0 0
  %337 = vperm.xlu0 %336, %v334
  %v338 = vpop.permute.xlu0 %337
  %v341 = vcombine.high %v261, %v261
  %v342 = vsel %vm106, %v341, 0
  %344 = vmatprep.subr.mxu0 %v263
  %345 = vmatpush1.msra.mxu0 %v262
  %346 = vmatprep.subr.mxu0 %v267
  %347 = vmatpush1.msra.mxu0 %v266
  %348 = vmatprep.subr.mxu0 %v271
  %349 = vmatpush1.msra.mxu0 %v270
  %350 = vmatprep.subr.mxu0 %v275
  %351 = vmatpush1.msra.mxu0 %v274
  %352 = vmatprep.subr.mxu0 %v279
  %353 = vmatpush1.msra.mxu0 %v278
  %354 = vmatprep.subr.mxu0 %v283
  %355 = vmatpush1.msra.mxu0 %v282
  %356 = vmatprep.subr.mxu0 %v287
  %357 = vmatpush1.msra.mxu0 %v286
  %358 = vmatprep.subr.mxu0 %v291
  %359 = vmatpush1.msra.mxu0 %v290
  %360 = vmatprep.subr.mxu0 %v295
  %361 = vmatpush1.msra.mxu0 %v294
  %362 = vmatprep.subr.mxu0 %v299
  %363 = vmatpush1.msra.mxu0 %v298
  %364 = vmatprep.subr.mxu0 %v303
  %365 = vmatpush1.msra.mxu0 %v302
  %366 = vmatprep.subr.mxu0 %v307
  %367 = vmatpush1.msra.mxu0 %v306
  %368 = vmatprep.subr.mxu0 %v311
  %369 = vmatpush1.msra.mxu0 %v310
  %370 = vmatprep.subr.mxu0 %v315
  %371 = vmatpush1.msra.mxu0 %v314
  %372 = vmatprep.subr.mxu0 %v319
  %373 = vmatpush1.msra.mxu0 %v318
  %374 = vmatprep.subr.mxu0 %v323
  %375 = vmatpush1.msra.mxu0 %v322
  %376 = vmatprep.subr.mxu0 %v327
  %377 = vmatpush1.msra.mxu0 %v326
  %378 = vmatprep.subr.mxu0 %v331
  %379 = vmatpush1.msra.mxu0 %v330
  %380 = vmatprep.subr.mxu0 0.0
  %381 = vmatpush1.msra.mxu0 0.0
  %382 = vmatprep.subr.mxu0 0.0
  %383 = vmatpush1.msra.mxu0 0.0
  %384 = vmatprep.subr.mxu0 0.0
  %385 = vmatpush1.msra.mxu0 0.0
  %386 = vmatprep.subr.mxu0 0.0
  %387 = vmatpush1.msra.mxu0 0.0
  %388 = vmatprep.subr.mxu0 0.0
  %389 = vmatpush1.msra.mxu0 0.0
  %390 = vmatprep.subr.mxu0 0.0
  %391 = vmatpush1.msra.mxu0 0.0
  %392 = vmatprep.subr.mxu0 0.0
  %393 = vmatpush1.msra.mxu0 0.0
  %394 = vmatprep.subr.mxu0 0.0
  %395 = vmatpush1.msra.mxu0 0.0
  %396 = vmatprep.subr.mxu0 0.0
  %397 = vmatpush1.msra.mxu0 0.0
  %398 = vmatprep.subr.mxu0 0.0
  %399 = vmatpush1.msra.mxu0 0.0
  %400 = vmatprep.subr.mxu0 0.0
  %401 = vmatpush1.msra.mxu0 0.0
  %402 = vmatprep.subr.mxu0 0.0
  %403 = vmatpush1.msra.mxu0 0.0
  %404 = vmatprep.subr.mxu0 0.0
  %405 = vmatpush1.msra.mxu0 0.0
  %406 = vmatprep.subr.mxu0 0.0
  %407 = vmatpush1.msra.mxu0 0.0
  %408 = vmatprep.mubr.f32.mxu0 %v342
  %409 = vmatmul.mubr.f32.gmra.mrb[0].mxu0 %v261
  %v410 = vpop.f32.mrb[0].mxu0
  %v411 = vadd.f32 %v338, %v410
  %v412 = vpop.f32.mrb[0].mxu0
  %v413 = vadd.f32 %v338, %v412
  %414 = vdwg.mxu0
  %415 = vmatprep.subr.mxu0 %v265
  %416 = vmatpush1.msra.mxu0 %v264
  %417 = vmatprep.subr.mxu0 %v269
  %418 = vmatpush1.msra.mxu0 %v268
  %419 = vmatprep.subr.mxu0 %v273
  %420 = vmatpush1.msra.mxu0 %v272
  %421 = vmatprep.subr.mxu0 %v277
  %422 = vmatpush1.msra.mxu0 %v276
  %423 = vmatprep.subr.mxu0 %v281
  %424 = vmatpush1.msra.mxu0 %v280
  %425 = vmatprep.subr.mxu0 %v285
  %426 = vmatpush1.msra.mxu0 %v284
  %427 = vmatprep.subr.mxu0 %v289
  %428 = vmatpush1.msra.mxu0 %v288
  %429 = vmatprep.subr.mxu0 %v293
  %430 = vmatpush1.msra.mxu0 %v292
  %431 = vmatprep.subr.mxu0 %v297
  %432 = vmatpush1.msra.mxu0 %v296
  %433 = vmatprep.subr.mxu0 %v301
  %434 = vmatpush1.msra.mxu0 %v300
  %435 = vmatprep.subr.mxu0 %v305
  %436 = vmatpush1.msra.mxu0 %v304
  %437 = vmatprep.subr.mxu0 %v309
  %438 = vmatpush1.msra.mxu0 %v308
  %439 = vmatprep.subr.mxu0 %v313
  %440 = vmatpush1.msra.mxu0 %v312
  %441 = vmatprep.subr.mxu0 %v317
  %442 = vmatpush1.msra.mxu0 %v316
  %443 = vmatprep.subr.mxu0 %v321
  %444 = vmatpush1.msra.mxu0 %v320
  %445 = vmatprep.subr.mxu0 %v325
  %446 = vmatpush1.msra.mxu0 %v324
  %447 = vmatprep.subr.mxu0 %v329
  %448 = vmatpush1.msra.mxu0 %v328
  %449 = vmatprep.subr.mxu0 %v333
  %450 = vmatpush1.msra.mxu0 %v332
  %451 = vmatprep.subr.mxu0 0.0
  %452 = vmatpush1.msra.mxu0 0.0
  %453 = vmatprep.subr.mxu0 0.0
  %454 = vmatpush1.msra.mxu0 0.0
  %455 = vmatprep.subr.mxu0 0.0
  %456 = vmatpush1.msra.mxu0 0.0
  %457 = vmatprep.subr.mxu0 0.0
  %458 = vmatpush1.msra.mxu0 0.0
  %459 = vmatprep.subr.mxu0 0.0
  %460 = vmatpush1.msra.mxu0 0.0
  %461 = vmatprep.subr.mxu0 0.0
  %462 = vmatpush1.msra.mxu0 0.0
  %463 = vmatprep.subr.mxu0 0.0
  %464 = vmatpush1.msra.mxu0 0.0
  %465 = vmatprep.subr.mxu0 0.0
  %466 = vmatpush1.msra.mxu0 0.0
  %467 = vmatprep.subr.mxu0 0.0
  %468 = vmatpush1.msra.mxu0 0.0
  %469 = vmatprep.subr.mxu0 0.0
  %470 = vmatpush1.msra.mxu0 0.0
  %471 = vmatprep.subr.mxu0 0.0
  %472 = vmatpush1.msra.mxu0 0.0
  %473 = vmatprep.subr.mxu0 0.0
  %474 = vmatpush1.msra.mxu0 0.0
  %475 = vmatprep.subr.mxu0 0.0
  %476 = vmatpush1.msra.mxu0 0.0
  %477 = vmatprep.subr.mxu0 0.0
  %478 = vmatpush1.msra.mxu0 0.0
  %479 = vmatprep.mubr.f32.mxu0 %v342
  %480 = vmatmul.mubr.f32.gmra.mrb[0].mxu0 %v261
  %v481 = vpop.f32.mrb[0].mxu0
  %v482 = vadd.f32 %v338, %v481
  %v483 = vpop.f32.mrb[0].mxu0
  %v484 = vadd.f32 %v338, %v483
  %485 = vdwg.mxu0
  %v486 = vxor.u32 %v411, 2147483648
  %v487 = vxor.u32 %v413, 2147483648
  %v488 = vxor.u32 %v482, 2147483648
  %v489 = vxor.u32 %v484, 2147483648
  %v490 = vmul.f32 %v486, 1.442695
  %v491 = vpow.pop %v490
  %v492 = vmul.f32 %v487, 1.442695
  %v493 = vpow.pop %v492
  %v494 = vmul.f32 %v488, 1.442695
  %v495 = vpow.pop %v494
  %v496 = vmul.f32 %v489, 1.442695
  %v497 = vpow.pop %v496
  %v498 = vadd.f32 %v491, 1.0
  %v499 = vadd.f32 %v493, 1.0
  %v500 = vadd.f32 %v495, 1.0
  %v501 = vadd.f32 %v497, 1.0
  %v502 = vrcp.pop %v498
  %v503 = vmul.f32 1.0, %v502
  %v504 = vrcp.pop %v499
  %v505 = vmul.f32 1.0, %v504
  %v506 = vrcp.pop %v500
  %v507 = vmul.f32 1.0, %v506
  %v508 = vrcp.pop %v501
  %v509 = vmul.f32 1.0, %v508
  %v514 = vcombine.low %v503, %v505
  %v515 = vcombine.low %v507, %v509
  %518 = vst [vmem:[%s7] sm:$0xff] %v514
  %519 = vst [vmem:[%s7 + $0x8] sm:$0xff] %v515
  // Predicated region
  $region26: #{bimodel_forward.7} parent=0 // pred_check
    _
  $region27: #{bimodel_forward.7} parent=0 // pred_check_branch
    %521 = sbr.rel (0) target = $region29
  $region28: #{bimodel_forward.7} parent=0 // pred_region
    _
  $region29: #{bimodel_forward.7} parent=0 // pred_fallthru
    _
  // Predicated region
  $region30: #{bimodel_forward.7} parent=0 // pred_check
    _
  $region31: #{bimodel_forward.7} parent=0 // pred_check_branch
    %523 = sbr.rel (0) target = $region33
  $region32: #{bimodel_forward.7} parent=0 // pred_region
    _
  $region33: #{bimodel_forward.7} parent=0 // pred_fallthru
    _
  // Predicated region
  $region34: #{bimodel_forward.7} parent=0 // pred_check
    _
  $region35: #{bimodel_forward.7} parent=0 // pred_check_branch
    %525 = sbr.rel (0) target = $region37
  $region36: #{bimodel_forward.7} parent=0 // pred_region
    _
  $region37: #{bimodel_forward.7} parent=0 // pred_fallthru
    _
  // Predicated region
  $region38: #{bimodel_forward.7} parent=0 // pred_check
    _
  $region39: #{bimodel_forward.7} parent=0 // pred_check_branch
    %527 = sbr.rel (0) target = $region41
  $region40: #{bimodel_forward.7} parent=0 // pred_region
    _
  $region41: #{bimodel_forward.7} parent=0 // pred_fallthru
    _

</llo_original>
